<compile_context>
chip_gen: v6e
topology: v6e:2x2x1
jax: 0.10.0
libtpu: 0.0.40
codegen_flags: <defaults>
</compile_context>

<pallas_src>
import functools

import jax
import jax.numpy as jnp
from jax.experimental import pallas as pl
from jax.experimental.pallas import tpu as pltpu


def ensemble_ad_kernel(x_ref, w1xb_ref, w2bd_ref, b2_ref, wf_ref, bf_ref, o_ref):
    """One (batch, point-tile) grid step.

    x_ref    : (1, P+1, tn) f32  points + constant ones row (for the fused enc bias)
    w1xb_ref : (1, KH, P+1) bf16 layer-1 weights; last column = per-batch enc@w1_e + b1
    w2bd_ref : (K64, KH)    bf16 layer-2 weights, block-diagonal over the ensemble
    b2_ref   : (K64, 1)     f32  layer-2 bias
    wf_ref   : (P, K64)     bf16 fc_final weights (cat over ensemble == one matmul)
    bf_ref   : (P, 1)       f32  fc_final bias
    o_ref    : (1, P, tn)
    """
    xa = x_ref[0]                                                        # (P+1, tn) f32
    xb = xa.astype(jnp.bfloat16)
    # Layer 1 (encoding bias folded into the matmul via the ones row).
    h = jnp.dot(w1xb_ref[0], xb, preferred_element_type=jnp.float32)     # (KH, tn)
    h = jnp.maximum(h, 0.0).astype(jnp.bfloat16)
    # Layer 2: all K experts as one block-diagonal matmul.
    o = jnp.dot(w2bd_ref[...], h, preferred_element_type=jnp.float32)    # (K64, tn)
    o = jnp.maximum(o + b2_ref[...], 0.0).astype(jnp.bfloat16)
    # Final 1x1 conv over the concatenated expert outputs.
    acc = jnp.dot(wf_ref[...], o, preferred_element_type=jnp.float32)    # (P, tn)
    # Residual in f32 (xa[:-1] drops the ones row).
    o_ref[0] = (xa[:-1] + acc + bf_ref[...]).astype(o_ref.dtype)


def _choose_point_tile(n_padded, batch, tn_max):
    """Largest multiple of 128 dividing n_padded, capped at tn_max; keep >=2 grid steps."""
    cap = min(tn_max, n_padded)
    if batch == 1 and n_padded >= 256:
        cap = min(cap, n_padded // 2)     # v7x: leave work for both TensorCores
    tn = max(128, (cap // 128) * 128)
    while n_padded % tn != 0:
        tn -= 128
    return tn


@functools.partial(jax.jit, static_argnames=("tn_max",))
def ensemble_autodecoder(X, encoding, params, tn_max=1024):
    """X: (B, P, N) f32, encoding: (B, E) f32 -> (B, P, N) f32."""
    B, P, N = X.shape
    E = encoding.shape[1]
    w1, b1, w2, b2, wf, bf = (params["w1"], params["b1"], params["w2"],
                              params["b2"], params["wf"], params["bf"])
    K, Cin, H = w1.shape
    assert Cin == P + E
    KH = K * H
    K64 = K * 64

    # ---- point-axis tiling (with remainder padding) ------------------------------
    Np = ((N + 127) // 128) * 128
    tn = _choose_point_tile(Np, B, tn_max)

    # ---- input augmentation: ones channel carries the fused encoding bias --------
    ones_row = jnp.ones((B, 1, N), X.dtype)
    X_aug = jnp.concatenate([X, ones_row], axis=1)                       # (B, P+1, N)
    if Np != N:
        X_aug = jnp.pad(X_aug, ((0, 0), (0, 0), (0, Np - N)))            # zero pad points

    # ---- weight packing (tiny, trace-time) ----------------------------------------
    # layer-1 point part, transposed & stacked over K: (KH, P)
    w1x_t = jnp.transpose(w1[:, :P, :], (0, 2, 1)).reshape(KH, P)
    # per-batch encoding contribution with b1 fused in: (B, KH)
    enc_bias = (jnp.einsum("be,keh->bkh", encoding, w1[:, P:, :]) + b1[None]).reshape(B, KH)
    # per-batch layer-1 weight: point columns + enc-bias column, bf16 for the MXU
    w1xb = jnp.concatenate(
        [jnp.broadcast_to(w1x_t[None], (B, KH, P)), enc_bias[:, :, None]], axis=2
    ).astype(jnp.bfloat16)                                               # (B, KH, P+1)
    # layer 2 as a single block-diagonal matmul: (K64, KH), bf16
    w2_bd = jnp.zeros((K64, KH), jnp.float32)
    for k in range(K):
        w2_bd = w2_bd.at[k * 64:(k + 1) * 64, k * H:(k + 1) * H].set(jnp.transpose(w2[k]))
    w2_bd = w2_bd.astype(jnp.bfloat16)
    b2s = b2.reshape(K64, 1).astype(jnp.float32)
    # fc_final: cat over ensemble then 1x1 conv == one (P, K64) matmul, bf16
    wf_t = jnp.transpose(wf.reshape(K64, P)).astype(jnp.bfloat16)        # (P, K64)
    bf2 = bf.reshape(P, 1).astype(jnp.float32)

    # ---- cost hint for XLA scheduling ----------------------------------------------
    flops = 2 * B * Np * (KH * (P + 1) + K64 * KH + P * K64)
    bytes_accessed = 4 * B * Np * (2 * P + 1) + 2 * (B * KH * (P + 1) + K64 * KH + P * K64)
    cost = pl.CostEstimate(flops=flops, transcendentals=0, bytes_accessed=bytes_accessed)

    out = pl.pallas_call(
        ensemble_ad_kernel,
        out_shape=jax.ShapeDtypeStruct((B, P, Np), X.dtype),
        grid_spec=pltpu.PrefetchScalarGridSpec(
            num_scalar_prefetch=0,
            grid=(B, Np // tn),
            in_specs=[
                pl.BlockSpec((1, P + 1, tn), lambda b, j: (b, 0, j)),   # X (+ ones row)
                pl.BlockSpec((1, KH, P + 1), lambda b, j: (b, 0, 0)),   # per-batch w1
                pl.BlockSpec((K64, KH), lambda b, j: (0, 0)),           # w2 block-diag
                pl.BlockSpec((K64, 1), lambda b, j: (0, 0)),            # b2
                pl.BlockSpec((P, K64), lambda b, j: (0, 0)),            # wf
                pl.BlockSpec((P, 1), lambda b, j: (0, 0)),              # bf
            ],
            out_specs=pl.BlockSpec((1, P, tn), lambda b, j: (b, 0, j)),
        ),
        compiler_params=pltpu.CompilerParams(
            dimension_semantics=("parallel", "parallel")),
        cost_estimate=cost,
        # NOTE: could add input_output_aliases={0: 0} when the caller donates X.
    )(X_aug, w1xb, w2_bd, b2s, wf_t, bf2)

    if Np != N:
        out = out[:, :, :N]
    return out


def reference_forward(X, encoding, params):
    """Pure-JAX f32 reference of the original (unfused) math, for verification."""
    B, P, N = X.shape
    E = encoding.shape[1]
    enc = jnp.broadcast_to(encoding[:, :, None], (B, E, N))
    X_enc = jnp.concatenate([X, enc], axis=1)                     # (B, Cin, N)
    xr = jnp.transpose(X_enc, (0, 2, 1))                          # (B, N, Cin)
    K = params["w1"].shape[0]
    acc = 0.0
    for k in range(K):
        h = jax.nn.relu(xr @ params["w1"][k] + params["b1"][k])
        o = jax.nn.relu(h @ params["w2"][k] + params["b2"][k])
        acc = acc + o @ params["wf"][k]
    out = jnp.transpose(X, (0, 2, 1)) + acc + params["bf"]
    return jnp.transpose(out, (0, 2, 1))


def init_params(key, K, point_dim, encoding_size, hidden):
    cin = point_dim + encoding_size
    ks = jax.random.split(key, 6)
    scale = 0.05
    return {
        "w1": scale * jax.random.normal(ks[0], (K, cin, hidden), jnp.float32),
        "b1": scale * jax.random.normal(ks[1], (K, hidden), jnp.float32),
        "w2": scale * jax.random.normal(ks[2], (K, hidden, 64), jnp.float32),
        "b2": scale * jax.random.normal(ks[3], (K, 64), jnp.float32),
        "wf": scale * jax.random.normal(ks[4], (K, 64, point_dim), jnp.float32),
        "bf": scale * jax.random.normal(ks[5], (point_dim,), jnp.float32),
    }


if __name__ == "__main__":
    # Small shapes consistent with the module's forward.
    B, point_dim, num_points = 2, 3, 1024
    encoding_size, hidden, K = 32, 64, 2

    key = jax.random.PRNGKey(0)
    kx, kenc, kp = jax.random.split(key, 3)
    X = jax.random.normal(kx, (B, point_dim, num_points), jnp.float32)
    encoding = jax.random.normal(kenc, (B, encoding_size), jnp.float32)
    params = init_params(kp, K, point_dim, encoding_size, hidden)

    out = ensemble_autodecoder(X, encoding, params, tn_max=1024)
    out = jax.block_until_ready(out)
    ref = reference_forward(X, encoding, params)
    assert out.shape == (B, point_dim, num_points)
    # bf16 MXU operands (f32 accumulation) -> loosened tolerance vs. the f32 reference.
    assert jnp.allclose(out, ref, atol=1e-2, rtol=1e-2), "mismatch vs JAX reference"

    # Second check: point count that is not a multiple of 128 (exercises the padding path).
    num_points2 = 1000
    X2 = jax.random.normal(jax.random.PRNGKey(1), (B, point_dim, num_points2), jnp.float32)
    out2 = jax.block_until_ready(ensemble_autodecoder(X2, encoding, params, tn_max=1024))
    ref2 = reference_forward(X2, encoding, params)
    assert out2.shape == (B, point_dim, num_points2)
    assert jnp.allclose(out2, ref2, atol=1e-2, rtol=1e-2), "mismatch (padded path)"

    print("KERNEL_OK")
</pallas_src>

<mosaic_0001>
module attributes {stable_mosaic.version = 11 : i64} {
  func.func @ensemble_ad_kernel(%arg0: i32, %arg1: i32, %arg2: memref<1x4x1024xf32, #tpu.memory_space<vmem>>, %arg3: memref<1x128x4xbf16, #tpu.memory_space<vmem>>, %arg4: memref<128x128xbf16, #tpu.memory_space<vmem>>, %arg5: memref<128x1xf32, #tpu.memory_space<vmem>>, %arg6: memref<3x128xbf16, #tpu.memory_space<vmem>>, %arg7: memref<3x1xf32, #tpu.memory_space<vmem>>, %arg8: memref<1x3x1024xf32, #tpu.memory_space<vmem>>) attributes {dimension_semantics = [#tpu.dimension_semantics<parallel>, #tpu.dimension_semantics<parallel>], iteration_bounds = array<i64: 2, 1>, scalar_prefetch = 0 : i64, scratch_operands = 0 : i64, tpu.core_type = #tpu.core_type<tc>, window_params = [{transform_indices = @transform_0, window_bounds = array<i64: 1, 4, 1024>}, {transform_indices = @transform_1, window_bounds = array<i64: 1, 128, 4>}, {pipeline_mode = #tpu.pipeline_mode<synchronous>, transform_indices = @transform_2, window_bounds = array<i64: 128, 128>}, {pipeline_mode = #tpu.pipeline_mode<synchronous>, transform_indices = @transform_3, window_bounds = array<i64: 128, 1>}, {pipeline_mode = #tpu.pipeline_mode<synchronous>, transform_indices = @transform_4, window_bounds = array<i64: 3, 128>}, {pipeline_mode = #tpu.pipeline_mode<synchronous>, transform_indices = @transform_5, window_bounds = array<i64: 3, 1>}, {transform_indices = @transform_6, window_bounds = array<i64: 1, 3, 1024>}]} {
    %c0 = arith.constant 0 : index
    %c0_0 = arith.constant 0 : index
    %c0_1 = arith.constant 0 : index
    %0 = vector.load %arg2[%c0, %c0_0, %c0_1] : memref<1x4x1024xf32, #tpu.memory_space<vmem>>, vector<1x4x1024xf32>
    %1 = vector.shape_cast %0 : vector<1x4x1024xf32> to vector<4x1024xf32>
    %2 = arith.truncf %1 : vector<4x1024xf32> to vector<4x1024xbf16>
    %c0_2 = arith.constant 0 : index
    %c0_3 = arith.constant 0 : index
    %c0_4 = arith.constant 0 : index
    %3 = vector.load %arg3[%c0_2, %c0_3, %c0_4] : memref<1x128x4xbf16, #tpu.memory_space<vmem>>, vector<1x128x4xbf16>
    %4 = vector.shape_cast %3 : vector<1x128x4xbf16> to vector<128x4xbf16>
    %cst = arith.constant dense<0.000000e+00> : vector<128x1024xf32>
    %5 = tpu.matmul %4, %2, %cst {dimension_numbers = #tpu.dot_dimension_numbers<[1], [0], [0], [1], [0, 0, 1, 1], [], []>} : vector<128x4xbf16>, vector<4x1024xbf16>, vector<128x1024xf32> -> vector<128x1024xf32>
    %cst_5 = arith.constant 0.000000e+00 : f32
    %6 = vector.broadcast %cst_5 : f32 to vector<128x1024xf32>
    %7 = arith.maximumf %5, %6 : vector<128x1024xf32>
    %8 = arith.truncf %7 : vector<128x1024xf32> to vector<128x1024xbf16>
    %c0_6 = arith.constant 0 : index
    %c0_7 = arith.constant 0 : index
    %9 = vector.load %arg4[%c0_6, %c0_7] : memref<128x128xbf16, #tpu.memory_space<vmem>>, vector<128x128xbf16>
    %cst_8 = arith.constant dense<0.000000e+00> : vector<128x1024xf32>
    %10 = tpu.matmul %9, %8, %cst_8 {dimension_numbers = #tpu.dot_dimension_numbers<[1], [0], [0], [1], [0, 0, 1, 1], [], []>} : vector<128x128xbf16>, vector<128x1024xbf16>, vector<128x1024xf32> -> vector<128x1024xf32>
    %c0_9 = arith.constant 0 : index
    %c0_10 = arith.constant 0 : index
    %11 = vector.load %arg5[%c0_9, %c0_10] : memref<128x1xf32, #tpu.memory_space<vmem>>, vector<128x1xf32>
    %12 = vector.broadcast %11 : vector<128x1xf32> to vector<128x1024xf32>
    %13 = arith.addf %10, %12 : vector<128x1024xf32>
    %cst_11 = arith.constant 0.000000e+00 : f32
    %14 = vector.broadcast %cst_11 : f32 to vector<128x1024xf32>
    %15 = arith.maximumf %13, %14 : vector<128x1024xf32>
    %16 = arith.truncf %15 : vector<128x1024xf32> to vector<128x1024xbf16>
    %c0_12 = arith.constant 0 : index
    %c0_13 = arith.constant 0 : index
    %17 = vector.load %arg6[%c0_12, %c0_13] : memref<3x128xbf16, #tpu.memory_space<vmem>>, vector<3x128xbf16>
    %cst_14 = arith.constant dense<0.000000e+00> : vector<3x1024xf32>
    %18 = tpu.matmul %17, %16, %cst_14 {dimension_numbers = #tpu.dot_dimension_numbers<[1], [0], [0], [1], [0, 0, 1, 1], [], []>} : vector<3x128xbf16>, vector<128x1024xbf16>, vector<3x1024xf32> -> vector<3x1024xf32>
    %19 = vector.extract_strided_slice %1 {offsets = [0, 0], sizes = [3, 1024], strides = [1, 1]} : vector<4x1024xf32> to vector<3x1024xf32>
    %20 = arith.addf %19, %18 : vector<3x1024xf32>
    %c0_15 = arith.constant 0 : index
    %c0_16 = arith.constant 0 : index
    %21 = vector.load %arg7[%c0_15, %c0_16] : memref<3x1xf32, #tpu.memory_space<vmem>>, vector<3x1xf32>
    %22 = vector.broadcast %21 : vector<3x1xf32> to vector<3x1024xf32>
    %23 = arith.addf %20, %22 : vector<3x1024xf32>
    %c0_17 = arith.constant 0 : index
    %c0_18 = arith.constant 0 : index
    %c0_19 = arith.constant 0 : index
    %24 = vector.load %arg8[%c0_17, %c0_18, %c0_19] : memref<1x3x1024xf32, #tpu.memory_space<vmem>>, vector<1x3x1024xf32>
    %25 = vector.shape_cast %24 : vector<1x3x1024xf32> to vector<3x1024xf32>
    %26 = vector.shape_cast %23 : vector<3x1024xf32> to vector<1x3x1024xf32>
    tpu.vector_store %arg8[%c0_17, %c0_18, %c0_19], %26 {strides = array<i32>} : memref<1x3x1024xf32, #tpu.memory_space<vmem>>, vector<1x3x1024xf32>,
    return
  }
  func.func @transform_0(%arg0: i32, %arg1: i32) -> (i32, i32, i32) {
    %c0_i32 = arith.constant 0 : i32
    %c0_i32_0 = arith.constant 0 : i32
    return %arg0, %c0_i32, %arg1 : i32, i32, i32
  }
  func.func @transform_1(%arg0: i32, %arg1: i32) -> (i32, i32, i32) {
    %c0_i32 = arith.constant 0 : i32
    %c0_i32_0 = arith.constant 0 : i32
    %c0_i32_1 = arith.constant 0 : i32
    return %arg0, %c0_i32, %c0_i32_0 : i32, i32, i32
  }
  func.func @transform_2(%arg0: i32, %arg1: i32) -> (i32, i32) {
    %c0_i32 = arith.constant 0 : i32
    %c0_i32_0 = arith.constant 0 : i32
    %c0_i32_1 = arith.constant 0 : i32
    return %c0_i32, %c0_i32_0 : i32, i32
  }
  func.func @transform_3(%arg0: i32, %arg1: i32) -> (i32, i32) {
    %c0_i32 = arith.constant 0 : i32
    %c0_i32_0 = arith.constant 0 : i32
    %c0_i32_1 = arith.constant 0 : i32
    return %c0_i32, %c0_i32_0 : i32, i32
  }
  func.func @transform_4(%arg0: i32, %arg1: i32) -> (i32, i32) {
    %c0_i32 = arith.constant 0 : i32
    %c0_i32_0 = arith.constant 0 : i32
    %c0_i32_1 = arith.constant 0 : i32
    return %c0_i32, %c0_i32_0 : i32, i32
  }
  func.func @transform_5(%arg0: i32, %arg1: i32) -> (i32, i32) {
    %c0_i32 = arith.constant 0 : i32
    %c0_i32_0 = arith.constant 0 : i32
    %c0_i32_1 = arith.constant 0 : i32
    return %c0_i32, %c0_i32_0 : i32, i32
  }
  func.func @transform_6(%arg0: i32, %arg1: i32) -> (i32, i32, i32) {
    %c0_i32 = arith.constant 0 : i32
    %c0_i32_0 = arith.constant 0 : i32
    return %arg0, %c0_i32, %arg1 : i32, i32, i32
  }
}

</mosaic_0001>

<llo_original>
// kernel: ensemble_autodecoder.1
$region0: #{ensemble_autodecoder.1}
  #allocation0 [shape = 'u32[]', space=smem, size = 0x4, offset = 0x4, fixed_abs, tag = 'smem constant byte address 0x4 - core index']
  #allocation1 [shape = 'u32[144,128]{1,0:T(1,128)}', space=vmem, size = 0x12000, scoped, tag = 'internal scratch']
  %s0 = inlined_call_operand.vmem [shape: f32[2,4,1024], index: 0, kind: input, shape index: {}]
  %s1 = inlined_call_operand.vmem [shape: bf16[2,128,4], index: 1, kind: input, shape index: {}]
  %s2 = inlined_call_operand.vmem [shape: bf16[128,128], index: 2, kind: input, shape index: {}]
  %s3 = inlined_call_operand.vmem [shape: f32[128,1], index: 3, kind: input, shape index: {}]
  %s4 = inlined_call_operand.vmem [shape: bf16[3,128], index: 4, kind: input, shape index: {}]
  %s5 = inlined_call_operand.vmem [shape: f32[3,1], index: 5, kind: input, shape index: {}]
  %s6 = inlined_call_operand.vmem [shape: f32[2,3,1024], index: 6, kind: output, shape index: {}]
  %s7 = sld [smem:[#allocation0]]
  $region57: #{ensemble_autodecoder.1} parent=0
    _
  %s9 = ssub.s32 1, %s7
  %s10 = scalar_select 0, %s9, %s7
  loop: start=0, step=1, limit=4
  $region2: #{ensemble_autodecoder.1} parent=0 // loop_pre_header
    _
  $region3: #{ensemble_autodecoder.1} parent=0 // loop_header
    %s12 = sphi 0, %s16
    %p13 = scmp.ge.s32.totalorder %s12, 4
    %s19 = sphi 0, %s31
    %s20 = sphi 0, %s27
    %s21 = sphi 0, %s19
    %s22 = sphi 0, %s20
    %s23 = sphi 0, %s21
    %s24 = sphi 0, %s22
    %s36 = sphi 0, %s38
    %s39 = sphi 0, %s36
    %s40 = sphi 0, %s39
    %s56 = sphi 0, %s40
    %s62 = sphi 0, %s64
    %s65 = sphi 0, %s62
    %s66 = sphi 0, %s65
    %s82 = sphi 0, %s66
    %s86 = sphi 0, %s86
    %s88 = sphi 0, %s86
    %s89 = sphi 0, %s88
    %s103 = sphi 0, %s89
    %s107 = sphi 0, %s107
    %s109 = sphi 0, %s107
    %s110 = sphi 0, %s109
    %s124 = sphi 0, %s110
    %s128 = sphi 0, %s128
    %s130 = sphi 0, %s128
    %s131 = sphi 0, %s130
    %s145 = sphi 0, %s131
    %s149 = sphi 0, %s149
    %s151 = sphi 0, %s149
    %s152 = sphi 0, %s151
    %s166 = sphi 0, %s152
    %s174 = sphi 0, %s176
    %s177 = sphi 0, %s174
    %s178 = sphi 0, %s177
    %s194 = sphi 0, %s178
  $region4: #{ensemble_autodecoder.1} parent=0 // loop_header_branch
    %15 = sbr.rel (%p13) target = $region8
  $region5: #{ensemble_autodecoder.1} parent=0 // loop_body
    %s17 = ssub.s32 %s12, 1
    %s18 = ssub.s32 %s12, 2
    %s25 = sadd.s32 1, %s20
    %p26 = scmp.ge.s32.totalorder %s25, 1
    %s27 = scalar_select %p26, 0, %s25
    %s28 = sadd.s32 1, %s19
    %s29 = scalar_select %p26, %s28, %s19
    %p30 = scmp.ge.s32.totalorder %s29, 2
    %s31 = scalar_select %p30, 0, %s29
    %s32 = ssub.s32 %s19, %s31
    %s33 = ssub.s32 %s20, %s27
    %s34 = sor.u32 %s32, %s33
    %p35 = scmp.eq.s32.totalorder %s34, 0
    %s37 = sadd.s32 %s36, 1
    %s38 = scalar_select %p35, %s36, %s37
    %p41 = pneg %p35
    %p42 = scmp.eq.s32.totalorder %s12, 1
    %p43 = por %p41, %p42
    %p44 = scmp.ne.s32.totalorder %s36, %s39
    %p45 = scmp.eq.s32.totalorder %s12, 0
    %p46 = por %p44, %p45
    %p47 = scmp.ne.s32.totalorder %s36, %s39
    %p48 = scmp.eq.s32.totalorder %s17, 1
    %p49 = por %p47, %p48
    %p50 = scmp.ne.s32.totalorder %s39, %s40
    %p51 = scmp.eq.s32.totalorder %s17, 0
    %p52 = por %p50, %p51
    %p53 = scmp.ne.s32.totalorder %s39, %s40
    %p54 = scmp.eq.s32.totalorder %s18, 1
    %p55 = por %p53, %p54
    %p57 = scmp.ne.s32.totalorder %s40, %s56
    %p58 = scmp.eq.s32.totalorder %s18, 0
    %p59 = por %p57, %p58
    %s60 = ssub.s32 %s19, %s31
    %p61 = scmp.eq.s32.totalorder %s60, 0
    %s63 = sadd.s32 %s62, 1
    %s64 = scalar_select %p61, %s62, %s63
    %p67 = pneg %p61
    %p68 = scmp.eq.s32.totalorder %s12, 1
    %p69 = por %p67, %p68
    %p70 = scmp.ne.s32.totalorder %s62, %s65
    %p71 = scmp.eq.s32.totalorder %s12, 0
    %p72 = por %p70, %p71
    %p73 = scmp.ne.s32.totalorder %s62, %s65
    %p74 = scmp.eq.s32.totalorder %s17, 1
    %p75 = por %p73, %p74
    %p76 = scmp.ne.s32.totalorder %s65, %s66
    %p77 = scmp.eq.s32.totalorder %s17, 0
    %p78 = por %p76, %p77
    %p79 = scmp.ne.s32.totalorder %s65, %s66
    %p80 = scmp.eq.s32.totalorder %s18, 1
    %p81 = por %p79, %p80
    %p83 = scmp.ne.s32.totalorder %s66, %s82
    %p84 = scmp.eq.s32.totalorder %s18, 0
    %p85 = por %p83, %p84
    %s87 = sadd.s32 %s86, 1
    %p90 = scmp.eq.s32.totalorder %s12, 1
    %p91 = scmp.ne.s32.totalorder %s86, %s88
    %p92 = scmp.eq.s32.totalorder %s12, 0
    %p93 = por %p91, %p92
    %p94 = scmp.ne.s32.totalorder %s86, %s88
    %p95 = scmp.eq.s32.totalorder %s17, 1
    %p96 = por %p94, %p95
    %p97 = scmp.ne.s32.totalorder %s88, %s89
    %p98 = scmp.eq.s32.totalorder %s17, 0
    %p99 = por %p97, %p98
    %p100 = scmp.ne.s32.totalorder %s88, %s89
    %p101 = scmp.eq.s32.totalorder %s18, 1
    %p102 = por %p100, %p101
    %p104 = scmp.ne.s32.totalorder %s89, %s103
    %p105 = scmp.eq.s32.totalorder %s18, 0
    %p106 = por %p104, %p105
    %s108 = sadd.s32 %s107, 1
    %p111 = scmp.eq.s32.totalorder %s12, 1
    %p112 = scmp.ne.s32.totalorder %s107, %s109
    %p113 = scmp.eq.s32.totalorder %s12, 0
    %p114 = por %p112, %p113
    %p115 = scmp.ne.s32.totalorder %s107, %s109
    %p116 = scmp.eq.s32.totalorder %s17, 1
    %p117 = por %p115, %p116
    %p118 = scmp.ne.s32.totalorder %s109, %s110
    %p119 = scmp.eq.s32.totalorder %s17, 0
    %p120 = por %p118, %p119
    %p121 = scmp.ne.s32.totalorder %s109, %s110
    %p122 = scmp.eq.s32.totalorder %s18, 1
    %p123 = por %p121, %p122
    %p125 = scmp.ne.s32.totalorder %s110, %s124
    %p126 = scmp.eq.s32.totalorder %s18, 0
    %p127 = por %p125, %p126
    %s129 = sadd.s32 %s128, 1
    %p132 = scmp.eq.s32.totalorder %s12, 1
    %p133 = scmp.ne.s32.totalorder %s128, %s130
    %p134 = scmp.eq.s32.totalorder %s12, 0
    %p135 = por %p133, %p134
    %p136 = scmp.ne.s32.totalorder %s128, %s130
    %p137 = scmp.eq.s32.totalorder %s17, 1
    %p138 = por %p136, %p137
    %p139 = scmp.ne.s32.totalorder %s130, %s131
    %p140 = scmp.eq.s32.totalorder %s17, 0
    %p141 = por %p139, %p140
    %p142 = scmp.ne.s32.totalorder %s130, %s131
    %p143 = scmp.eq.s32.totalorder %s18, 1
    %p144 = por %p142, %p143
    %p146 = scmp.ne.s32.totalorder %s131, %s145
    %p147 = scmp.eq.s32.totalorder %s18, 0
    %p148 = por %p146, %p147
    %s150 = sadd.s32 %s149, 1
    %p153 = scmp.eq.s32.totalorder %s12, 1
    %p154 = scmp.ne.s32.totalorder %s149, %s151
    %p155 = scmp.eq.s32.totalorder %s12, 0
    %p156 = por %p154, %p155
    %p157 = scmp.ne.s32.totalorder %s149, %s151
    %p158 = scmp.eq.s32.totalorder %s17, 1
    %p159 = por %p157, %p158
    %p160 = scmp.ne.s32.totalorder %s151, %s152
    %p161 = scmp.eq.s32.totalorder %s17, 0
    %p162 = por %p160, %p161
    %p163 = scmp.ne.s32.totalorder %s151, %s152
    %p164 = scmp.eq.s32.totalorder %s18, 1
    %p165 = por %p163, %p164
    %p167 = scmp.ne.s32.totalorder %s152, %s166
    %p168 = scmp.eq.s32.totalorder %s18, 0
    %p169 = por %p167, %p168
    %s170 = ssub.s32 %s19, %s31
    %s171 = ssub.s32 %s20, %s27
    %s172 = sor.u32 %s170, %s171
    %p173 = scmp.eq.s32.totalorder %s172, 0
    %s175 = sadd.s32 %s174, 1
    %s176 = scalar_select %p173, %s174, %s175
    %p179 = pneg %p173
    %p180 = scmp.eq.s32.totalorder %s12, 1
    %p181 = por %p179, %p180
    %p182 = scmp.ne.s32.totalorder %s174, %s177
    %p183 = scmp.eq.s32.totalorder %s12, 0
    %p184 = por %p182, %p183
    %p185 = scmp.ne.s32.totalorder %s174, %s177
    %p186 = scmp.eq.s32.totalorder %s17, 1
    %p187 = por %p185, %p186
    %p188 = scmp.ne.s32.totalorder %s177, %s178
    %p189 = scmp.eq.s32.totalorder %s17, 0
    %p190 = por %p188, %p189
    %p191 = scmp.ne.s32.totalorder %s177, %s178
    %p192 = scmp.eq.s32.totalorder %s18, 1
    %p193 = por %p191, %p192
    %p195 = scmp.ne.s32.totalorder %s178, %s194
    %p196 = scmp.eq.s32.totalorder %s18, 0
    %p197 = por %p195, %p196
    %p198 = scmp.le.s32.totalorder 1, %s12
    %p199 = scmp.lt.s32.totalorder %s12, 3
    %p200 = pnand %p198, %p199
    %p201 = pneg %p200
    // Predicated region
    $region9: #{ensemble_autodecoder.1} parent=5 // pred_check
      _
    $region10: #{ensemble_autodecoder.1} parent=5 // pred_check_branch
      %203 = sbr.rel (%p200) target = $region12
    $region11: #{ensemble_autodecoder.1} parent=5 // pred_region
      %s204 = ssub.s32 %s12, 1
      // Predicated region
      $region13: #{ensemble_autodecoder.1} parent=11 // pred_check
        %p205 = pneg %p99
      $region14: #{ensemble_autodecoder.1} parent=11 // pred_check_branch
        %207 = sbr.rel (%p205) target = $region16
      $region15: #{ensemble_autodecoder.1} parent=11 // pred_region
        _
      $region16: #{ensemble_autodecoder.1} parent=11 // pred_fallthru
        _
      // Predicated region
      $region17: #{ensemble_autodecoder.1} parent=11 // pred_check
        %p208 = pneg %p120
      $region18: #{ensemble_autodecoder.1} parent=11 // pred_check_branch
        %210 = sbr.rel (%p208) target = $region20
      $region19: #{ensemble_autodecoder.1} parent=11 // pred_region
        _
      $region20: #{ensemble_autodecoder.1} parent=11 // pred_fallthru
        _
      // Predicated region
      $region21: #{ensemble_autodecoder.1} parent=11 // pred_check
        %p211 = pneg %p141
      $region22: #{ensemble_autodecoder.1} parent=11 // pred_check_branch
        %213 = sbr.rel (%p211) target = $region24
      $region23: #{ensemble_autodecoder.1} parent=11 // pred_region
        _
      $region24: #{ensemble_autodecoder.1} parent=11 // pred_fallthru
        _
      // Predicated region
      $region25: #{ensemble_autodecoder.1} parent=11 // pred_check
        %p214 = pneg %p162
      $region26: #{ensemble_autodecoder.1} parent=11 // pred_check_branch
        %216 = sbr.rel (%p214) target = $region28
      $region27: #{ensemble_autodecoder.1} parent=11 // pred_region
        _
      $region28: #{ensemble_autodecoder.1} parent=11 // pred_fallthru
        _
    $region12: #{ensemble_autodecoder.1} parent=5 // pred_fallthru
      _
    %p217 = scmp.lt.s32.totalorder %s12, 2
    // Predicated region
    $region29: #{ensemble_autodecoder.1} parent=5 // pred_check
      %p218 = pneg %p217
    $region30: #{ensemble_autodecoder.1} parent=5 // pred_check_branch
      %220 = sbr.rel (%p218) target = $region32
    $region31: #{ensemble_autodecoder.1} parent=5 // pred_region
      // Predicated region
      $region33: #{ensemble_autodecoder.1} parent=31 // pred_check
        %p221 = pneg %p46
      $region34: #{ensemble_autodecoder.1} parent=31 // pred_check_branch
        %223 = sbr.rel (%p221) target = $region36
      $region35: #{ensemble_autodecoder.1} parent=31 // pred_region
        %s224 = smul.u32 8, %s20
        %p225 = scmp.lt.s32.totalorder %s19, 1
        %s226 = scalar_select %p225, %s19, 1
        %p227 = scmp.lt.s32.totalorder %s224, 7
        %s228 = scalar_select %p227, %s224, 7
        %s229 = smul.addr %s226, 8
        %s230 = sadd.s32 %s228, %s229
        %s231 = smul.addr %s230, 4
        %s232 = scalar_lea.vmem %s0, %s231
        %s233 = smul.u32 8, %s20
      $region36: #{ensemble_autodecoder.1} parent=31 // pred_fallthru
        _
      // Predicated region
      $region37: #{ensemble_autodecoder.1} parent=31 // pred_check
        %p234 = pneg %p72
      $region38: #{ensemble_autodecoder.1} parent=31 // pred_check_branch
        %236 = sbr.rel (%p234) target = $region40
      $region39: #{ensemble_autodecoder.1} parent=31 // pred_region
        %p237 = scmp.lt.s32.totalorder %s19, 1
        %s238 = scalar_select %p237, %s19, 1
        %s239 = smul.addr %s238, 16
        %s240 = smul.addr %s239, 4
        %s241 = scalar_lea.vmem %s1, %s240
      $region40: #{ensemble_autodecoder.1} parent=31 // pred_fallthru
        _
    $region32: #{ensemble_autodecoder.1} parent=5 // pred_fallthru
      _
    %p242 = scmp.le.s32.totalorder 1, %s12
    %p243 = scmp.lt.s32.totalorder %s12, 3
    %p244 = pnand %p242, %p243
    %p245 = pneg %p244
    // Predicated region
    $region41: #{ensemble_autodecoder.1} parent=5 // pred_check
      _
    $region42: #{ensemble_autodecoder.1} parent=5 // pred_check_branch
      %247 = sbr.rel (%p244) target = $region44
    $region43: #{ensemble_autodecoder.1} parent=5 // pred_region
      %s248 = ssub.s32 %s12, 1
      %s249 = smul.u32 8, %s22
      %p250 = scmp.lt.s32.totalorder %s21, 1
      %s251 = scalar_select %p250, %s21, 1
      %p252 = scmp.lt.s32.totalorder %s249, 7
      %s253 = scalar_select %p252, %s249, 7
      %s254 = smul.addr %s251, 8
      %s255 = sadd.s32 %s253, %s254
      %s256 = smul.addr %s255, 4
      %s257 = scalar_lea.vmem %s0, %s256
      %p258 = pneg %p52
      %p259 = pneg %p49
      %p260 = scmp.lt.s32.totalorder %s21, 1
      %s261 = scalar_select %p260, %s21, 1
      %s262 = smul.addr %s261, 16
      %s263 = smul.addr %s262, 4
      %s264 = scalar_lea.vmem %s1, %s263
      %p265 = pneg %p78
      %p266 = pneg %p75
      %p267 = pneg %p99
      %p268 = pneg %p96
      %p269 = pneg %p120
      %p270 = pneg %p117
      %p271 = pneg %p141
      %p272 = pneg %p138
      %p273 = pneg %p162
      %p274 = pneg %p159
      %p275 = pneg %p190
      %p276 = pneg %p187
      %s277 = smul.u32 8, %s22
      %p278 = scmp.lt.s32.totalorder %s21, 1
      %s279 = scalar_select %p278, %s21, 1
      %p280 = scmp.lt.s32.totalorder %s277, 7
      %s281 = scalar_select %p280, %s277, 7
      %s282 = smul.addr %s279, 8
      %s283 = sadd.s32 %s281, %s282
      %s284 = smul.addr %s283, 4
      %s285 = scalar_lea.vmem %s6, %s284
      %s286 = smul.u32 8, %s22
      %p287 = scmp.lt.s32.totalorder %s21, 1
      %s288 = scalar_select %p287, %s21, 1
      %p289 = scmp.lt.s32.totalorder %s286, 7
      %s290 = scalar_select %p289, %s286, 7
      %s291 = smul.addr %s288, 8
      %s292 = sadd.s32 %s290, %s291
      %s293 = smul.addr %s292, 4
      %s294 = scalar_lea.vmem %s0, %s293
      %s295 = smul.u32 8, %s22
      %p296 = scmp.lt.s32.totalorder %s21, 1
      %s297 = scalar_select %p296, %s21, 1
      %s298 = smul.addr %s297, 16
      %s299 = smul.addr %s298, 4
      %s300 = scalar_lea.vmem %s1, %s299
      %s301 = smul.u32 8, %s22
      %p302 = scmp.lt.s32.totalorder %s21, 1
      %s303 = scalar_select %p302, %s21, 1
      %p304 = scmp.lt.s32.totalorder %s301, 7
      %s305 = scalar_select %p304, %s301, 7
      %s306 = smul.addr %s303, 8
      %s307 = sadd.s32 %s305, %s306
      %s308 = smul.addr %s307, 4
      %s309 = scalar_lea.vmem %s6, %s308
      %s310 = smul.u32 8, %s22
      %v312 = vld [vmem:[%s294] sm:$0xff]
      %v313 = vld [vmem:[%s294 + $0x8] sm:$0xff]
      %v314 = vld [vmem:[%s294 + $0x10] sm:$0xff]
      %v315 = vld [vmem:[%s294 + $0x18] sm:$0xff]
      %v320 = vcombine.high %v312, %v312
      %v321 = vcombine.high %v313, %v313
      %v322 = vcombine.high %v314, %v314
      %v323 = vcombine.high %v315, %v315
      %v328 = vpack.c.bf16 %v312, %v312
      %v329 = vpack.c.bf16 %v320, %v320
      %v330 = vpack.c.bf16 %v313, %v313
      %v331 = vpack.c.bf16 %v321, %v321
      %v332 = vpack.c.bf16 %v314, %v314
      %v333 = vpack.c.bf16 %v322, %v322
      %v334 = vpack.c.bf16 %v315, %v315
      %v335 = vpack.c.bf16 %v323, %v323
      %v336 = vld [vmem:[%s300] sm:$0xf]
      %v337 = vld [vmem:[%s300 + $0x4] sm:$0xf]
      %v338 = vld [vmem:[%s300 + $0x8] sm:$0xf]
      %v339 = vld [vmem:[%s300 + $0xc] sm:$0xf]
      %v340 = vld [vmem:[%s300 + $0x10] sm:$0xf]
      %v341 = vld [vmem:[%s300 + $0x14] sm:$0xf]
      %v342 = vld [vmem:[%s300 + $0x18] sm:$0xf]
      %v343 = vld [vmem:[%s300 + $0x1c] sm:$0xf]
      %v344 = vld [vmem:[%s300 + $0x20] sm:$0xf]
      %v345 = vld [vmem:[%s300 + $0x24] sm:$0xf]
      %v346 = vld [vmem:[%s300 + $0x28] sm:$0xf]
      %v347 = vld [vmem:[%s300 + $0x2c] sm:$0xf]
      %v348 = vld [vmem:[%s300 + $0x30] sm:$0xf]
      %v349 = vld [vmem:[%s300 + $0x34] sm:$0xf]
      %v350 = vld [vmem:[%s300 + $0x38] sm:$0xf]
      %v351 = vld [vmem:[%s300 + $0x3c] sm:$0xf]
      %v368 = vunpack.c.l.b16 %v336
      %v369 = vunpack.c.l.b16 %v337
      %v370 = vunpack.c.l.b16 %v338
      %v371 = vunpack.c.l.b16 %v339
      %v372 = vunpack.c.l.b16 %v340
      %v373 = vunpack.c.l.b16 %v341
      %v374 = vunpack.c.l.b16 %v342
      %v375 = vunpack.c.l.b16 %v343
      %v376 = vunpack.c.l.b16 %v344
      %v377 = vunpack.c.l.b16 %v345
      %v378 = vunpack.c.l.b16 %v346
      %v379 = vunpack.c.l.b16 %v347
      %v380 = vunpack.c.l.b16 %v348
      %v381 = vunpack.c.l.b16 %v349
      %v382 = vunpack.c.l.b16 %v350
      %v383 = vunpack.c.l.b16 %v351
      %v384 = vpack.c.b16 %v369, %v368
      %v385 = vpack.c.b16 %v371, %v370
      %v386 = vpack.c.b16 %v373, %v372
      %v387 = vpack.c.b16 %v375, %v374
      %v388 = vpack.c.b16 %v377, %v376
      %v389 = vpack.c.b16 %v379, %v378
      %v390 = vpack.c.b16 %v381, %v380
      %v391 = vpack.c.b16 %v383, %v382
      %vm392 = vcmask 31744
      %v394 = vsel %vm392, %v384, 0
      %v397 = vsel %vm392, %v385, 0
      %v400 = vsel %vm392, %v386, 0
      %v403 = vsel %vm392, %v387, 0
      %v406 = vsel %vm392, %v388, 0
      %v409 = vsel %vm392, %v389, 0
      %v412 = vsel %vm392, %v390, 0
      %v415 = vsel %vm392, %v391, 0
      %vm417 = vcmask 1041408
      %v419 = vsel %vm417, %v328, 0
      %v422 = vsel %vm417, %v329, 0
      %v425 = vsel %vm417, %v330, 0
      %v428 = vsel %vm417, %v331, 0
      %v431 = vsel %vm417, %v332, 0
      %v434 = vsel %vm417, %v333, 0
      %v437 = vsel %vm417, %v334, 0
      %v440 = vsel %vm417, %v335, 0
      %442 = vmatprep.subr.bf16.mxu0 0
      %443 = vmatpush1.bf16.msra.mxu0 0
      %444 = vmatprep.subr.bf16.mxu0 0
      %445 = vmatpush1.bf16.msra.mxu0 0
      %446 = vmatprep.subr.bf16.mxu0 0
      %447 = vmatpush1.bf16.msra.mxu0 0
      %448 = vmatprep.subr.bf16.mxu0 0
      %449 = vmatpush1.bf16.msra.mxu0 0
      %450 = vmatprep.subr.bf16.mxu0 0
      %451 = vmatpush1.bf16.msra.mxu0 0
      %452 = vmatprep.subr.bf16.mxu0 0
      %453 = vmatpush1.bf16.msra.mxu0 0
      %454 = vmatprep.subr.bf16.mxu0 0
      %455 = vmatpush1.bf16.msra.mxu0 0
      %456 = vmatprep.subr.bf16.mxu0 %v422
      %457 = vmatpush1.bf16.msra.mxu0 %v419
      %458 = vmatprep.subr.bf16.mxu0 0
      %459 = vmatpush2.bf16.msra.mxu0 0
      %460 = vmatprep.subr.bf16.mxu0 0
      %461 = vmatpush2.bf16.msra.mxu0 0
      %462 = vmatprep.subr.bf16.mxu0 0
      %463 = vmatpush2.bf16.msra.mxu0 0
      %464 = vmatprep.subr.bf16.mxu0 0
      %465 = vmatpush2.bf16.msra.mxu0 0
      %466 = vmatprep.subr.bf16.mxu0 0
      %467 = vmatpush2.bf16.msra.mxu0 0
      %468 = vmatprep.subr.bf16.mxu0 0
      %469 = vmatpush2.bf16.msra.mxu0 0
      %470 = vmatprep.subr.bf16.mxu0 0
      %471 = vmatpush2.bf16.msra.mxu0 0
      %472 = vmatprep.subr.bf16.mxu0 0
      %473 = vmatpush2.bf16.msra.mxu0 0
      %474 = vmatprep.mubr.bf16.mxu0 0
      %475 = vmatmul.mubr.bf16.gmra.mxu0 %v394
      %v476 = vpop.f32.mrf.mxu0
      %v477 = vadd.f32 0.0, %v476
      %v478 = vpop.f32.mrf.mxu0
      %v479 = vadd.f32 0.0, %v478
      %v480 = vpop.f32.mrf.mxu0
      %v481 = vadd.f32 0.0, %v480
      %v482 = vpop.f32.mrf.mxu0
      %v483 = vadd.f32 0.0, %v482
      %484 = vmatprep.mubr.bf16.mxu0 0
      %485 = vmatmul.mubr.bf16.gmra.mxu0 %v397
      %v486 = vpop.f32.mrf.mxu0
      %v487 = vadd.f32 0.0, %v486
      %v488 = vpop.f32.mrf.mxu0
      %v489 = vadd.f32 0.0, %v488
      %v490 = vpop.f32.mrf.mxu0
      %v491 = vadd.f32 0.0, %v490
      %v492 = vpop.f32.mrf.mxu0
      %v493 = vadd.f32 0.0, %v492
      %494 = vmatprep.mubr.bf16.mxu0 0
      %495 = vmatmul.mubr.bf16.gmra.mxu0 %v400
      %v496 = vpop.f32.mrf.mxu0
      %v497 = vadd.f32 0.0, %v496
      %v498 = vpop.f32.mrf.mxu0
      %v499 = vadd.f32 0.0, %v498
      %v500 = vpop.f32.mrf.mxu0
      %v501 = vadd.f32 0.0, %v500
      %v502 = vpop.f32.mrf.mxu0
      %v503 = vadd.f32 0.0, %v502
      %504 = vmatprep.mubr.bf16.mxu0 0
      %505 = vmatmul.mubr.bf16.gmra.mxu0 %v403
      %v506 = vpop.f32.mrf.mxu0
      %v507 = vadd.f32 0.0, %v506
      %v508 = vpop.f32.mrf.mxu0
      %v509 = vadd.f32 0.0, %v508
      %v510 = vpop.f32.mrf.mxu0
      %v511 = vadd.f32 0.0, %v510
      %v512 = vpop.f32.mrf.mxu0
      %v513 = vadd.f32 0.0, %v512
      %514 = vmatprep.mubr.bf16.mxu0 0
      %515 = vmatmul.mubr.bf16.gmra.mxu0 %v406
      %v516 = vpop.f32.mrf.mxu0
      %v517 = vadd.f32 0.0, %v516
      %v518 = vpop.f32.mrf.mxu0
      %v519 = vadd.f32 0.0, %v518
      %v520 = vpop.f32.mrf.mxu0
      %v521 = vadd.f32 0.0, %v520
      %v522 = vpop.f32.mrf.mxu0
      %v523 = vadd.f32 0.0, %v522
      %524 = vmatprep.mubr.bf16.mxu0 0
      %525 = vmatmul.mubr.bf16.gmra.mxu0 %v409
      %v526 = vpop.f32.mrf.mxu0
      %v527 = vadd.f32 0.0, %v526
      %v528 = vpop.f32.mrf.mxu0
      %v529 = vadd.f32 0.0, %v528
      %v530 = vpop.f32.mrf.mxu0
      %v531 = vadd.f32 0.0, %v530
      %v532 = vpop.f32.mrf.mxu0
      %v533 = vadd.f32 0.0, %v532
      %534 = vmatprep.mubr.bf16.mxu0 0
      %535 = vmatmul.mubr.bf16.gmra.mxu0 %v412
      %v536 = vpop.f32.mrf.mxu0
      %v537 = vadd.f32 0.0, %v536
      %v538 = vpop.f32.mrf.mxu0
      %v539 = vadd.f32 0.0, %v538
      %v540 = vpop.f32.mrf.mxu0
      %v541 = vadd.f32 0.0, %v540
      %v542 = vpop.f32.mrf.mxu0
      %v543 = vadd.f32 0.0, %v542
      %544 = vmatprep.mubr.bf16.mxu0 0
      %545 = vmatmul.mubr.bf16.gmra.mxu0 %v415
      %v546 = vpop.f32.mrf.mxu0
      %v547 = vadd.f32 0.0, %v546
      %v548 = vpop.f32.mrf.mxu0
      %v549 = vadd.f32 0.0, %v548
      %v550 = vpop.f32.mrf.mxu0
      %v551 = vadd.f32 0.0, %v550
      %v552 = vpop.f32.mrf.mxu0
      %v553 = vadd.f32 0.0, %v552
      %554 = vdwg.mxu0
      %555 = vmatprep.subr.bf16.mxu0 0
      %556 = vmatpush1.bf16.msra.mxu0 0
      %557 = vmatprep.subr.bf16.mxu0 0
      %558 = vmatpush1.bf16.msra.mxu0 0
      %559 = vmatprep.subr.bf16.mxu0 0
      %560 = vmatpush1.bf16.msra.mxu0 0
      %561 = vmatprep.subr.bf16.mxu0 0
      %562 = vmatpush1.bf16.msra.mxu0 0
      %563 = vmatprep.subr.bf16.mxu0 0
      %564 = vmatpush1.bf16.msra.mxu0 0
      %565 = vmatprep.subr.bf16.mxu0 0
      %566 = vmatpush1.bf16.msra.mxu0 0
      %567 = vmatprep.subr.bf16.mxu0 0
      %568 = vmatpush1.bf16.msra.mxu0 0
      %569 = vmatprep.subr.bf16.mxu0 %v428
      %570 = vmatpush1.bf16.msra.mxu0 %v425
      %571 = vmatprep.subr.bf16.mxu0 0
      %572 = vmatpush2.bf16.msra.mxu0 0
      %573 = vmatprep.subr.bf16.mxu0 0
      %574 = vmatpush2.bf16.msra.mxu0 0
      %575 = vmatprep.subr.bf16.mxu0 0
      %576 = vmatpush2.bf16.msra.mxu0 0
      %577 = vmatprep.subr.bf16.mxu0 0
      %578 = vmatpush2.bf16.msra.mxu0 0
      %579 = vmatprep.subr.bf16.mxu0 0
      %580 = vmatpush2.bf16.msra.mxu0 0
      %581 = vmatprep.subr.bf16.mxu0 0
      %582 = vmatpush2.bf16.msra.mxu0 0
      %583 = vmatprep.subr.bf16.mxu0 0
      %584 = vmatpush2.bf16.msra.mxu0 0
      %585 = vmatprep.subr.bf16.mxu0 0
      %586 = vmatpush2.bf16.msra.mxu0 0
      %587 = vmatprep.mubr.bf16.mxu0 0
      %588 = vmatmul.mubr.bf16.gmra.mxu0 %v394
      %v589 = vpop.f32.mrf.mxu0
      %v590 = vadd.f32 0.0, %v589
      %v591 = vpop.f32.mrf.mxu0
      %v592 = vadd.f32 0.0, %v591
      %v593 = vpop.f32.mrf.mxu0
      %v594 = vadd.f32 0.0, %v593
      %v595 = vpop.f32.mrf.mxu0
      %v596 = vadd.f32 0.0, %v595
      %597 = vmatprep.mubr.bf16.mxu0 0
      %598 = vmatmul.mubr.bf16.gmra.mxu0 %v397
      %v599 = vpop.f32.mrf.mxu0
      %v600 = vadd.f32 0.0, %v599
      %v601 = vpop.f32.mrf.mxu0
      %v602 = vadd.f32 0.0, %v601
      %v603 = vpop.f32.mrf.mxu0
      %v604 = vadd.f32 0.0, %v603
      %v605 = vpop.f32.mrf.mxu0
      %v606 = vadd.f32 0.0, %v605
      %607 = vmatprep.mubr.bf16.mxu0 0
      %608 = vmatmul.mubr.bf16.gmra.mxu0 %v400
      %v609 = vpop.f32.mrf.mxu0
      %v610 = vadd.f32 0.0, %v609
      %v611 = vpop.f32.mrf.mxu0
      %v612 = vadd.f32 0.0, %v611
      %v613 = vpop.f32.mrf.mxu0
      %v614 = vadd.f32 0.0, %v613
      %v615 = vpop.f32.mrf.mxu0
      %v616 = vadd.f32 0.0, %v615
      %617 = vmatprep.mubr.bf16.mxu0 0
      %618 = vmatmul.mubr.bf16.gmra.mxu0 %v403
      %v619 = vpop.f32.mrf.mxu0
      %v620 = vadd.f32 0.0, %v619
      %v621 = vpop.f32.mrf.mxu0
      %v622 = vadd.f32 0.0, %v621
      %v623 = vpop.f32.mrf.mxu0
      %v624 = vadd.f32 0.0, %v623
      %v625 = vpop.f32.mrf.mxu0
      %v626 = vadd.f32 0.0, %v625
      %627 = vmatprep.mubr.bf16.mxu0 0
      %628 = vmatmul.mubr.bf16.gmra.mxu0 %v406
      %v629 = vpop.f32.mrf.mxu0
      %v630 = vadd.f32 0.0, %v629
      %v631 = vpop.f32.mrf.mxu0
      %v632 = vadd.f32 0.0, %v631
      %v633 = vpop.f32.mrf.mxu0
      %v634 = vadd.f32 0.0, %v633
      %v635 = vpop.f32.mrf.mxu0
      %v636 = vadd.f32 0.0, %v635
      %637 = vmatprep.mubr.bf16.mxu0 0
      %638 = vmatmul.mubr.bf16.gmra.mxu0 %v409
      %v639 = vpop.f32.mrf.mxu0
      %v640 = vadd.f32 0.0, %v639
      %v641 = vpop.f32.mrf.mxu0
      %v642 = vadd.f32 0.0, %v641
      %v643 = vpop.f32.mrf.mxu0
      %v644 = vadd.f32 0.0, %v643
      %v645 = vpop.f32.mrf.mxu0
      %v646 = vadd.f32 0.0, %v645
      %647 = vmatprep.mubr.bf16.mxu0 0
      %648 = vmatmul.mubr.bf16.gmra.mxu0 %v412
      %v649 = vpop.f32.mrf.mxu0
      %v650 = vadd.f32 0.0, %v649
      %v651 = vpop.f32.mrf.mxu0
      %v652 = vadd.f32 0.0, %v651
      %v653 = vpop.f32.mrf.mxu0
      %v654 = vadd.f32 0.0, %v653
      %v655 = vpop.f32.mrf.mxu0
      %v656 = vadd.f32 0.0, %v655
      %657 = vmatprep.mubr.bf16.mxu0 0
      %658 = vmatmul.mubr.bf16.gmra.mxu0 %v415
      %v659 = vpop.f32.mrf.mxu0
      %v660 = vadd.f32 0.0, %v659
      %v661 = vpop.f32.mrf.mxu0
      %v662 = vadd.f32 0.0, %v661
      %v663 = vpop.f32.mrf.mxu0
      %v664 = vadd.f32 0.0, %v663
      %v665 = vpop.f32.mrf.mxu0
      %v666 = vadd.f32 0.0, %v665
      %667 = vdwg.mxu0
      %668 = vmatprep.subr.bf16.mxu0 0
      %669 = vmatpush1.bf16.msra.mxu0 0
      %670 = vmatprep.subr.bf16.mxu0 0
      %671 = vmatpush1.bf16.msra.mxu0 0
      %672 = vmatprep.subr.bf16.mxu0 0
      %673 = vmatpush1.bf16.msra.mxu0 0
      %674 = vmatprep.subr.bf16.mxu0 0
      %675 = vmatpush1.bf16.msra.mxu0 0
      %676 = vmatprep.subr.bf16.mxu0 0
      %677 = vmatpush1.bf16.msra.mxu0 0
      %678 = vmatprep.subr.bf16.mxu0 0
      %679 = vmatpush1.bf16.msra.mxu0 0
      %680 = vmatprep.subr.bf16.mxu0 0
      %681 = vmatpush1.bf16.msra.mxu0 0
      %682 = vmatprep.subr.bf16.mxu0 %v434
      %683 = vmatpush1.bf16.msra.mxu0 %v431
      %684 = vmatprep.subr.bf16.mxu0 0
      %685 = vmatpush2.bf16.msra.mxu0 0
      %686 = vmatprep.subr.bf16.mxu0 0
      %687 = vmatpush2.bf16.msra.mxu0 0
      %688 = vmatprep.subr.bf16.mxu0 0
      %689 = vmatpush2.bf16.msra.mxu0 0
      %690 = vmatprep.subr.bf16.mxu0 0
      %691 = vmatpush2.bf16.msra.mxu0 0
      %692 = vmatprep.subr.bf16.mxu0 0
      %693 = vmatpush2.bf16.msra.mxu0 0
      %694 = vmatprep.subr.bf16.mxu0 0
      %695 = vmatpush2.bf16.msra.mxu0 0
      %696 = vmatprep.subr.bf16.mxu0 0
      %697 = vmatpush2.bf16.msra.mxu0 0
      %698 = vmatprep.subr.bf16.mxu0 0
      %699 = vmatpush2.bf16.msra.mxu0 0
      %700 = vmatprep.mubr.bf16.mxu0 0
      %701 = vmatmul.mubr.bf16.gmra.mxu0 %v394
      %v702 = vpop.f32.mrf.mxu0
      %v703 = vadd.f32 0.0, %v702
      %v704 = vpop.f32.mrf.mxu0
      %v705 = vadd.f32 0.0, %v704
      %v706 = vpop.f32.mrf.mxu0
      %v707 = vadd.f32 0.0, %v706
      %v708 = vpop.f32.mrf.mxu0
      %v709 = vadd.f32 0.0, %v708
      %710 = vmatprep.mubr.bf16.mxu0 0
      %711 = vmatmul.mubr.bf16.gmra.mxu0 %v397
      %v712 = vpop.f32.mrf.mxu0
      %v713 = vadd.f32 0.0, %v712
      %v714 = vpop.f32.mrf.mxu0
      %v715 = vadd.f32 0.0, %v714
      %v716 = vpop.f32.mrf.mxu0
      %v717 = vadd.f32 0.0, %v716
      %v718 = vpop.f32.mrf.mxu0
      %v719 = vadd.f32 0.0, %v718
      %720 = vmatprep.mubr.bf16.mxu0 0
      %721 = vmatmul.mubr.bf16.gmra.mxu0 %v400
      %v722 = vpop.f32.mrf.mxu0
      %v723 = vadd.f32 0.0, %v722
      %v724 = vpop.f32.mrf.mxu0
      %v725 = vadd.f32 0.0, %v724
      %v726 = vpop.f32.mrf.mxu0
      %v727 = vadd.f32 0.0, %v726
      %v728 = vpop.f32.mrf.mxu0
      %v729 = vadd.f32 0.0, %v728
      %730 = vmatprep.mubr.bf16.mxu0 0
      %731 = vmatmul.mubr.bf16.gmra.mxu0 %v403
      %v732 = vpop.f32.mrf.mxu0
      %v733 = vadd.f32 0.0, %v732
      %v734 = vpop.f32.mrf.mxu0
      %v735 = vadd.f32 0.0, %v734
      %v736 = vpop.f32.mrf.mxu0
      %v737 = vadd.f32 0.0, %v736
      %v738 = vpop.f32.mrf.mxu0
      %v739 = vadd.f32 0.0, %v738
      %740 = vmatprep.mubr.bf16.mxu0 0
      %741 = vmatmul.mubr.bf16.gmra.mxu0 %v406
      %v742 = vpop.f32.mrf.mxu0
      %v743 = vadd.f32 0.0, %v742
      %v744 = vpop.f32.mrf.mxu0
      %v745 = vadd.f32 0.0, %v744
      %v746 = vpop.f32.mrf.mxu0
      %v747 = vadd.f32 0.0, %v746
      %v748 = vpop.f32.mrf.mxu0
      %v749 = vadd.f32 0.0, %v748
      %750 = vmatprep.mubr.bf16.mxu0 0
      %751 = vmatmul.mubr.bf16.gmra.mxu0 %v409
      %v752 = vpop.f32.mrf.mxu0
      %v753 = vadd.f32 0.0, %v752
      %v754 = vpop.f32.mrf.mxu0
      %v755 = vadd.f32 0.0, %v754
      %v756 = vpop.f32.mrf.mxu0
      %v757 = vadd.f32 0.0, %v756
      %v758 = vpop.f32.mrf.mxu0
      %v759 = vadd.f32 0.0, %v758
      %760 = vmatprep.mubr.bf16.mxu0 0
      %761 = vmatmul.mubr.bf16.gmra.mxu0 %v412
      %v762 = vpop.f32.mrf.mxu0
      %v763 = vadd.f32 0.0, %v762
      %v764 = vpop.f32.mrf.mxu0
      %v765 = vadd.f32 0.0, %v764
      %v766 = vpop.f32.mrf.mxu0
      %v767 = vadd.f32 0.0, %v766
      %v768 = vpop.f32.mrf.mxu0
      %v769 = vadd.f32 0.0, %v768
      %770 = vmatprep.mubr.bf16.mxu0 0
      %771 = vmatmul.mubr.bf16.gmra.mxu0 %v415
      %v772 = vpop.f32.mrf.mxu0
      %v773 = vadd.f32 0.0, %v772
      %v774 = vpop.f32.mrf.mxu0
      %v775 = vadd.f32 0.0, %v774
      %v776 = vpop.f32.mrf.mxu0
      %v777 = vadd.f32 0.0, %v776
      %v778 = vpop.f32.mrf.mxu0
      %v779 = vadd.f32 0.0, %v778
      %780 = vdwg.mxu0
      %781 = vmatprep.subr.bf16.mxu0 0
      %782 = vmatpush1.bf16.msra.mxu0 0
      %783 = vmatprep.subr.bf16.mxu0 0
      %784 = vmatpush1.bf16.msra.mxu0 0
      %785 = vmatprep.subr.bf16.mxu0 0
      %786 = vmatpush1.bf16.msra.mxu0 0
      %787 = vmatprep.subr.bf16.mxu0 0
      %788 = vmatpush1.bf16.msra.mxu0 0
      %789 = vmatprep.subr.bf16.mxu0 0
      %790 = vmatpush1.bf16.msra.mxu0 0
      %791 = vmatprep.subr.bf16.mxu0 0
      %792 = vmatpush1.bf16.msra.mxu0 0
      %793 = vmatprep.subr.bf16.mxu0 0
      %794 = vmatpush1.bf16.msra.mxu0 0
      %795 = vmatprep.subr.bf16.mxu0 %v440
      %796 = vmatpush1.bf16.msra.mxu0 %v437
      %797 = vmatprep.subr.bf16.mxu0 0
      %798 = vmatpush2.bf16.msra.mxu0 0
      %799 = vmatprep.subr.bf16.mxu0 0
      %800 = vmatpush2.bf16.msra.mxu0 0
      %801 = vmatprep.subr.bf16.mxu0 0
      %802 = vmatpush2.bf16.msra.mxu0 0
      %803 = vmatprep.subr.bf16.mxu0 0
      %804 = vmatpush2.bf16.msra.mxu0 0
      %805 = vmatprep.subr.bf16.mxu0 0
      %806 = vmatpush2.bf16.msra.mxu0 0
      %807 = vmatprep.subr.bf16.mxu0 0
      %808 = vmatpush2.bf16.msra.mxu0 0
      %809 = vmatprep.subr.bf16.mxu0 0
      %810 = vmatpush2.bf16.msra.mxu0 0
      %811 = vmatprep.subr.bf16.mxu0 0
      %812 = vmatpush2.bf16.msra.mxu0 0
      %813 = vmatprep.mubr.bf16.mxu0 0
      %814 = vmatmul.mubr.bf16.gmra.mxu0 %v394
      %v815 = vpop.f32.mrf.mxu0
      %v816 = vadd.f32 0.0, %v815
      %v817 = vpop.f32.mrf.mxu0
      %v818 = vadd.f32 0.0, %v817
      %v819 = vpop.f32.mrf.mxu0
      %v820 = vadd.f32 0.0, %v819
      %v821 = vpop.f32.mrf.mxu0
      %v822 = vadd.f32 0.0, %v821
      %823 = vmatprep.mubr.bf16.mxu0 0
      %824 = vmatmul.mubr.bf16.gmra.mxu0 %v397
      %v825 = vpop.f32.mrf.mxu0
      %v826 = vadd.f32 0.0, %v825
      %v827 = vpop.f32.mrf.mxu0
      %v828 = vadd.f32 0.0, %v827
      %v829 = vpop.f32.mrf.mxu0
      %v830 = vadd.f32 0.0, %v829
      %v831 = vpop.f32.mrf.mxu0
      %v832 = vadd.f32 0.0, %v831
      %833 = vmatprep.mubr.bf16.mxu0 0
      %834 = vmatmul.mubr.bf16.gmra.mxu0 %v400
      %v835 = vpop.f32.mrf.mxu0
      %v836 = vadd.f32 0.0, %v835
      %v837 = vpop.f32.mrf.mxu0
      %v838 = vadd.f32 0.0, %v837
      %v839 = vpop.f32.mrf.mxu0
      %v840 = vadd.f32 0.0, %v839
      %v841 = vpop.f32.mrf.mxu0
      %v842 = vadd.f32 0.0, %v841
      %843 = vmatprep.mubr.bf16.mxu0 0
      %844 = vmatmul.mubr.bf16.gmra.mxu0 %v403
      %v845 = vpop.f32.mrf.mxu0
      %v846 = vadd.f32 0.0, %v845
      %v847 = vpop.f32.mrf.mxu0
      %v848 = vadd.f32 0.0, %v847
      %v849 = vpop.f32.mrf.mxu0
      %v850 = vadd.f32 0.0, %v849
      %v851 = vpop.f32.mrf.mxu0
      %v852 = vadd.f32 0.0, %v851
      %853 = vmatprep.mubr.bf16.mxu0 0
      %854 = vmatmul.mubr.bf16.gmra.mxu0 %v406
      %v855 = vpop.f32.mrf.mxu0
      %v856 = vadd.f32 0.0, %v855
      %v857 = vpop.f32.mrf.mxu0
      %v858 = vadd.f32 0.0, %v857
      %v859 = vpop.f32.mrf.mxu0
      %v860 = vadd.f32 0.0, %v859
      %v861 = vpop.f32.mrf.mxu0
      %v862 = vadd.f32 0.0, %v861
      %863 = vmatprep.mubr.bf16.mxu0 0
      %864 = vmatmul.mubr.bf16.gmra.mxu0 %v409
      %v865 = vpop.f32.mrf.mxu0
      %v866 = vadd.f32 0.0, %v865
      %v867 = vpop.f32.mrf.mxu0
      %v868 = vadd.f32 0.0, %v867
      %v869 = vpop.f32.mrf.mxu0
      %v870 = vadd.f32 0.0, %v869
      %v871 = vpop.f32.mrf.mxu0
      %v872 = vadd.f32 0.0, %v871
      %873 = vmatprep.mubr.bf16.mxu0 0
      %874 = vmatmul.mubr.bf16.gmra.mxu0 %v412
      %v875 = vpop.f32.mrf.mxu0
      %v876 = vadd.f32 0.0, %v875
      %v877 = vpop.f32.mrf.mxu0
      %v878 = vadd.f32 0.0, %v877
      %v879 = vpop.f32.mrf.mxu0
      %v880 = vadd.f32 0.0, %v879
      %v881 = vpop.f32.mrf.mxu0
      %v882 = vadd.f32 0.0, %v881
      %883 = vmatprep.mubr.bf16.mxu0 0
      %884 = vmatmul.mubr.bf16.gmra.mxu0 %v415
      %v885 = vpop.f32.mrf.mxu0
      %v886 = vadd.f32 0.0, %v885
      %v887 = vpop.f32.mrf.mxu0
      %v888 = vadd.f32 0.0, %v887
      %v889 = vpop.f32.mrf.mxu0
      %v890 = vadd.f32 0.0, %v889
      %v891 = vpop.f32.mrf.mxu0
      %v892 = vadd.f32 0.0, %v891
      %893 = vdwg.mxu0
      %v894 = vmax.f32 %v477, 0.0
      %v895 = vmax.f32 %v479, 0.0
      %v896 = vmax.f32 %v590, 0.0
      %v897 = vmax.f32 %v592, 0.0
      %v898 = vmax.f32 %v703, 0.0
      %v899 = vmax.f32 %v705, 0.0
      %v900 = vmax.f32 %v816, 0.0
      %v901 = vmax.f32 %v818, 0.0
      %v902 = vmax.f32 %v481, 0.0
      %v903 = vmax.f32 %v483, 0.0
      %v904 = vmax.f32 %v594, 0.0
      %v905 = vmax.f32 %v596, 0.0
      %v906 = vmax.f32 %v707, 0.0
      %v907 = vmax.f32 %v709, 0.0
      %v908 = vmax.f32 %v820, 0.0
      %v909 = vmax.f32 %v822, 0.0
      %v910 = vmax.f32 %v487, 0.0
      %v911 = vmax.f32 %v489, 0.0
      %v912 = vmax.f32 %v600, 0.0
      %v913 = vmax.f32 %v602, 0.0
      %v914 = vmax.f32 %v713, 0.0
      %v915 = vmax.f32 %v715, 0.0
      %v916 = vmax.f32 %v826, 0.0
      %v917 = vmax.f32 %v828, 0.0
      %v918 = vmax.f32 %v491, 0.0
      %v919 = vmax.f32 %v493, 0.0
      %v920 = vmax.f32 %v604, 0.0
      %v921 = vmax.f32 %v606, 0.0
      %v922 = vmax.f32 %v717, 0.0
      %v923 = vmax.f32 %v719, 0.0
      %v924 = vmax.f32 %v830, 0.0
      %v925 = vmax.f32 %v832, 0.0
      %v926 = vmax.f32 %v497, 0.0
      %v927 = vmax.f32 %v499, 0.0
      %v928 = vmax.f32 %v610, 0.0
      %v929 = vmax.f32 %v612, 0.0
      %v930 = vmax.f32 %v723, 0.0
      %v931 = vmax.f32 %v725, 0.0
      %v932 = vmax.f32 %v836, 0.0
      %v933 = vmax.f32 %v838, 0.0
      %v934 = vmax.f32 %v501, 0.0
      %v935 = vmax.f32 %v503, 0.0
      %v936 = vmax.f32 %v614, 0.0
      %v937 = vmax.f32 %v616, 0.0
      %v938 = vmax.f32 %v727, 0.0
      %v939 = vmax.f32 %v729, 0.0
      %v940 = vmax.f32 %v840, 0.0
      %v941 = vmax.f32 %v842, 0.0
      %v942 = vmax.f32 %v507, 0.0
      %v943 = vmax.f32 %v509, 0.0
      %v944 = vmax.f32 %v620, 0.0
      %v945 = vmax.f32 %v622, 0.0
      %v946 = vmax.f32 %v733, 0.0
      %v947 = vmax.f32 %v735, 0.0
      %v948 = vmax.f32 %v846, 0.0
      %v949 = vmax.f32 %v848, 0.0
      %v950 = vmax.f32 %v511, 0.0
      %v951 = vmax.f32 %v513, 0.0
      %v952 = vmax.f32 %v624, 0.0
      %v953 = vmax.f32 %v626, 0.0
      %v954 = vmax.f32 %v737, 0.0
      %v955 = vmax.f32 %v739, 0.0
      %v956 = vmax.f32 %v850, 0.0
      %v957 = vmax.f32 %v852, 0.0
      %v958 = vmax.f32 %v517, 0.0
      %v959 = vmax.f32 %v519, 0.0
      %v960 = vmax.f32 %v630, 0.0
      %v961 = vmax.f32 %v632, 0.0
      %v962 = vmax.f32 %v743, 0.0
      %v963 = vmax.f32 %v745, 0.0
      %v964 = vmax.f32 %v856, 0.0
      %v965 = vmax.f32 %v858, 0.0
      %v966 = vmax.f32 %v521, 0.0
      %v967 = vmax.f32 %v523, 0.0
      %v968 = vmax.f32 %v634, 0.0
      %v969 = vmax.f32 %v636, 0.0
      %v970 = vmax.f32 %v747, 0.0
      %v971 = vmax.f32 %v749, 0.0
      %v972 = vmax.f32 %v860, 0.0
      %v973 = vmax.f32 %v862, 0.0
      %v974 = vmax.f32 %v527, 0.0
      %v975 = vmax.f32 %v529, 0.0
      %v976 = vmax.f32 %v640, 0.0
      %v977 = vmax.f32 %v642, 0.0
      %v978 = vmax.f32 %v753, 0.0
      %v979 = vmax.f32 %v755, 0.0
      %v980 = vmax.f32 %v866, 0.0
      %v981 = vmax.f32 %v868, 0.0
      %v982 = vmax.f32 %v531, 0.0
      %v983 = vmax.f32 %v533, 0.0
      %v984 = vmax.f32 %v644, 0.0
      %v985 = vmax.f32 %v646, 0.0
      %v986 = vmax.f32 %v757, 0.0
      %v987 = vmax.f32 %v759, 0.0
      %v988 = vmax.f32 %v870, 0.0
      %v989 = vmax.f32 %v872, 0.0
      %v990 = vmax.f32 %v537, 0.0
      %v991 = vmax.f32 %v539, 0.0
      %v992 = vmax.f32 %v650, 0.0
      %v993 = vmax.f32 %v652, 0.0
      %v994 = vmax.f32 %v763, 0.0
      %v995 = vmax.f32 %v765, 0.0
      %v996 = vmax.f32 %v876, 0.0
      %v997 = vmax.f32 %v878, 0.0
      %v998 = vmax.f32 %v541, 0.0
      %v999 = vmax.f32 %v543, 0.0
      %v1000 = vmax.f32 %v654, 0.0
      %v1001 = vmax.f32 %v656, 0.0
      %v1002 = vmax.f32 %v767, 0.0
      %v1003 = vmax.f32 %v769, 0.0
      %v1004 = vmax.f32 %v880, 0.0
      %v1005 = vmax.f32 %v882, 0.0
      %v1006 = vmax.f32 %v547, 0.0
      %v1007 = vmax.f32 %v549, 0.0
      %v1008 = vmax.f32 %v660, 0.0
      %v1009 = vmax.f32 %v662, 0.0
      %v1010 = vmax.f32 %v773, 0.0
      %v1011 = vmax.f32 %v775, 0.0
      %v1012 = vmax.f32 %v886, 0.0
      %v1013 = vmax.f32 %v888, 0.0
      %v1014 = vmax.f32 %v551, 0.0
      %v1015 = vmax.f32 %v553, 0.0
      %v1016 = vmax.f32 %v664, 0.0
      %v1017 = vmax.f32 %v666, 0.0
      %v1018 = vmax.f32 %v777, 0.0
      %v1019 = vmax.f32 %v779, 0.0
      %v1020 = vmax.f32 %v890, 0.0
      %v1021 = vmax.f32 %v892, 0.0
      %v1022 = vpack.c.bf16 %v902, %v894
      %v1023 = vpack.c.bf16 %v903, %v895
      %v1024 = vpack.c.bf16 %v904, %v896
      %v1025 = vpack.c.bf16 %v905, %v897
      %v1026 = vpack.c.bf16 %v906, %v898
      %v1027 = vpack.c.bf16 %v907, %v899
      %v1028 = vpack.c.bf16 %v908, %v900
      %v1029 = vpack.c.bf16 %v909, %v901
      %v1030 = vpack.c.bf16 %v918, %v910
      %v1031 = vpack.c.bf16 %v919, %v911
      %v1032 = vpack.c.bf16 %v920, %v912
      %v1033 = vpack.c.bf16 %v921, %v913
      %v1034 = vpack.c.bf16 %v922, %v914
      %v1035 = vpack.c.bf16 %v923, %v915
      %v1036 = vpack.c.bf16 %v924, %v916
      %v1037 = vpack.c.bf16 %v925, %v917
      %v1038 = vpack.c.bf16 %v934, %v926
      %v1039 = vpack.c.bf16 %v935, %v927
      %v1040 = vpack.c.bf16 %v936, %v928
      %v1041 = vpack.c.bf16 %v937, %v929
      %v1042 = vpack.c.bf16 %v938, %v930
      %v1043 = vpack.c.bf16 %v939, %v931
      %v1044 = vpack.c.bf16 %v940, %v932
      %v1045 = vpack.c.bf16 %v941, %v933
      %v1046 = vpack.c.bf16 %v950, %v942
      %v1047 = vpack.c.bf16 %v951, %v943
      %v1048 = vpack.c.bf16 %v952, %v944
      %v1049 = vpack.c.bf16 %v953, %v945
      %v1050 = vpack.c.bf16 %v954, %v946
      %v1051 = vpack.c.bf16 %v955, %v947
      %v1052 = vpack.c.bf16 %v956, %v948
      %v1053 = vpack.c.bf16 %v957, %v949
      %v1054 = vpack.c.bf16 %v966, %v958
      %v1055 = vpack.c.bf16 %v967, %v959
      %v1056 = vpack.c.bf16 %v968, %v960
      %v1057 = vpack.c.bf16 %v969, %v961
      %v1058 = vpack.c.bf16 %v970, %v962
      %v1059 = vpack.c.bf16 %v971, %v963
      %v1060 = vpack.c.bf16 %v972, %v964
      %v1061 = vpack.c.bf16 %v973, %v965
      %v1062 = vpack.c.bf16 %v982, %v974
      %v1063 = vpack.c.bf16 %v983, %v975
      %v1064 = vpack.c.bf16 %v984, %v976
      %v1065 = vpack.c.bf16 %v985, %v977
      %v1066 = vpack.c.bf16 %v986, %v978
      %v1067 = vpack.c.bf16 %v987, %v979
      %v1068 = vpack.c.bf16 %v988, %v980
      %v1069 = vpack.c.bf16 %v989, %v981
      %v1070 = vpack.c.bf16 %v998, %v990
      %v1071 = vpack.c.bf16 %v999, %v991
      %v1072 = vpack.c.bf16 %v1000, %v992
      %v1073 = vpack.c.bf16 %v1001, %v993
      %v1074 = vpack.c.bf16 %v1002, %v994
      %v1075 = vpack.c.bf16 %v1003, %v995
      %v1076 = vpack.c.bf16 %v1004, %v996
      %v1077 = vpack.c.bf16 %v1005, %v997
      %v1078 = vpack.c.bf16 %v1014, %v1006
      %v1079 = vpack.c.bf16 %v1015, %v1007
      %v1080 = vpack.c.bf16 %v1016, %v1008
      %v1081 = vpack.c.bf16 %v1017, %v1009
      %v1082 = vpack.c.bf16 %v1018, %v1010
      %v1083 = vpack.c.bf16 %v1019, %v1011
      %v1084 = vpack.c.bf16 %v1020, %v1012
      %v1085 = vpack.c.bf16 %v1021, %v1013
      %v1086 = vld [vmem:[%s2] sm:$0xf]
      %v1087 = vld [vmem:[%s2 + $0x4] sm:$0xf]
      %v1088 = vld [vmem:[%s2 + $0x8] sm:$0xf]
      %v1089 = vld [vmem:[%s2 + $0xc] sm:$0xf]
      %v1090 = vld [vmem:[%s2 + $0x10] sm:$0xf]
      %v1091 = vld [vmem:[%s2 + $0x14] sm:$0xf]
      %v1092 = vld [vmem:[%s2 + $0x18] sm:$0xf]
      %v1093 = vld [vmem:[%s2 + $0x1c] sm:$0xf]
      %v1094 = vld [vmem:[%s2 + $0x20] sm:$0xf]
      %v1095 = vld [vmem:[%s2 + $0x24] sm:$0xf]
      %v1096 = vld [vmem:[%s2 + $0x28] sm:$0xf]
      %v1097 = vld [vmem:[%s2 + $0x2c] sm:$0xf]
      %v1098 = vld [vmem:[%s2 + $0x30] sm:$0xf]
      %v1099 = vld [vmem:[%s2 + $0x34] sm:$0xf]
      %v1100 = vld [vmem:[%s2 + $0x38] sm:$0xf]
      %v1101 = vld [vmem:[%s2 + $0x3c] sm:$0xf]
      %v1102 = vld [vmem:[%s3] sm:$0xff]
      %v1103 = vld [vmem:[%s3 + $0x8] sm:$0xff]
      %v1104 = vld [vmem:[%s3 + $0x10] sm:$0xff]
      %v1105 = vld [vmem:[%s3 + $0x18] sm:$0xff]
      %v1106 = vld [vmem:[%s3 + $0x20] sm:$0xff]
      %v1107 = vld [vmem:[%s3 + $0x28] sm:$0xff]
      %v1108 = vld [vmem:[%s3 + $0x30] sm:$0xff]
      %v1109 = vld [vmem:[%s3 + $0x38] sm:$0xff]
      %v1110 = vld [vmem:[%s3 + $0x40] sm:$0xff]
      %v1111 = vld [vmem:[%s3 + $0x48] sm:$0xff]
      %v1112 = vld [vmem:[%s3 + $0x50] sm:$0xff]
      %v1113 = vld [vmem:[%s3 + $0x58] sm:$0xff]
      %v1114 = vld [vmem:[%s3 + $0x60] sm:$0xff]
      %v1115 = vld [vmem:[%s3 + $0x68] sm:$0xff]
      %v1116 = vld [vmem:[%s3 + $0x70] sm:$0xff]
      %v1117 = vld [vmem:[%s3 + $0x78] sm:$0xff]
      %1119 = vset.pattern.permute.xlu0 0
      %1120 = vperm.xlu0 %1119, %v1102
      %v1121 = vpop.permute.xlu0 %1120
      %1124 = vset.pattern.permute.xlu0 0
      %1125 = vperm.xlu0 %1124, %v1103
      %v1126 = vpop.permute.xlu0 %1125
      %1129 = vset.pattern.permute.xlu0 0
      %1130 = vperm.xlu0 %1129, %v1104
      %v1131 = vpop.permute.xlu0 %1130
      %1134 = vset.pattern.permute.xlu0 0
      %1135 = vperm.xlu0 %1134, %v1105
      %v1136 = vpop.permute.xlu0 %1135
      %1139 = vset.pattern.permute.xlu0 0
      %1140 = vperm.xlu0 %1139, %v1106
      %v1141 = vpop.permute.xlu0 %1140
      %1144 = vset.pattern.permute.xlu0 0
      %1145 = vperm.xlu0 %1144, %v1107
      %v1146 = vpop.permute.xlu0 %1145
      %1149 = vset.pattern.permute.xlu0 0
      %1150 = vperm.xlu0 %1149, %v1108
      %v1151 = vpop.permute.xlu0 %1150
      %1154 = vset.pattern.permute.xlu0 0
      %1155 = vperm.xlu0 %1154, %v1109
      %v1156 = vpop.permute.xlu0 %1155
      %1159 = vset.pattern.permute.xlu0 0
      %1160 = vperm.xlu0 %1159, %v1110
      %v1161 = vpop.permute.xlu0 %1160
      %1164 = vset.pattern.permute.xlu0 0
      %1165 = vperm.xlu0 %1164, %v1111
      %v1166 = vpop.permute.xlu0 %1165
      %1169 = vset.pattern.permute.xlu0 0
      %1170 = vperm.xlu0 %1169, %v1112
      %v1171 = vpop.permute.xlu0 %1170
      %1174 = vset.pattern.permute.xlu0 0
      %1175 = vperm.xlu0 %1174, %v1113
      %v1176 = vpop.permute.xlu0 %1175
      %1179 = vset.pattern.permute.xlu0 0
      %1180 = vperm.xlu0 %1179, %v1114
      %v1181 = vpop.permute.xlu0 %1180
      %1184 = vset.pattern.permute.xlu0 0
      %1185 = vperm.xlu0 %1184, %v1115
      %v1186 = vpop.permute.xlu0 %1185
      %1189 = vset.pattern.permute.xlu0 0
      %1190 = vperm.xlu0 %1189, %v1116
      %v1191 = vpop.permute.xlu0 %1190
      %1194 = vset.pattern.permute.xlu0 0
      %1195 = vperm.xlu0 %1194, %v1117
      %v1196 = vpop.permute.xlu0 %1195
      %v1214 = vunpack.c.l.b16 %v1086
      %v1215 = vunpack.c.l.b16 %v1087
      %v1216 = vunpack.c.l.b16 %v1088
      %v1217 = vunpack.c.l.b16 %v1089
      %v1218 = vunpack.c.l.b16 %v1090
      %v1219 = vunpack.c.l.b16 %v1091
      %v1220 = vunpack.c.l.b16 %v1092
      %v1221 = vunpack.c.l.b16 %v1093
      %v1222 = vunpack.c.l.b16 %v1094
      %v1223 = vunpack.c.l.b16 %v1095
      %v1224 = vunpack.c.l.b16 %v1096
      %v1225 = vunpack.c.l.b16 %v1097
      %v1226 = vunpack.c.l.b16 %v1098
      %v1227 = vunpack.c.l.b16 %v1099
      %v1228 = vunpack.c.l.b16 %v1100
      %v1229 = vunpack.c.l.b16 %v1101
      %v1230 = vpack.c.b16 %v1215, %v1214
      %v1231 = vpack.c.b16 %v1217, %v1216
      %v1232 = vpack.c.b16 %v1219, %v1218
      %v1233 = vpack.c.b16 %v1221, %v1220
      %v1234 = vpack.c.b16 %v1223, %v1222
      %v1235 = vpack.c.b16 %v1225, %v1224
      %v1236 = vpack.c.b16 %v1227, %v1226
      %v1237 = vpack.c.b16 %v1229, %v1228
      %1246 = vmatprep.subr.bf16.mxu0 %v1079
      %1247 = vmatpush1.bf16.msra.mxu0 %v1078
      %1248 = vmatprep.subr.bf16.mxu0 %v1071
      %1249 = vmatpush1.bf16.msra.mxu0 %v1070
      %1250 = vmatprep.subr.bf16.mxu0 %v1063
      %1251 = vmatpush1.bf16.msra.mxu0 %v1062
      %1252 = vmatprep.subr.bf16.mxu0 %v1055
      %1253 = vmatpush1.bf16.msra.mxu0 %v1054
      %1254 = vmatprep.subr.bf16.mxu0 %v1047
      %1255 = vmatpush1.bf16.msra.mxu0 %v1046
      %1256 = vmatprep.subr.bf16.mxu0 %v1039
      %1257 = vmatpush1.bf16.msra.mxu0 %v1038
      %1258 = vmatprep.subr.bf16.mxu0 %v1031
      %1259 = vmatpush1.bf16.msra.mxu0 %v1030
      %1260 = vmatprep.subr.bf16.mxu0 %v1023
      %1261 = vmatpush1.bf16.msra.mxu0 %v1022
      %1262 = vmatprep.subr.bf16.mxu0 0
      %1263 = vmatpush2.bf16.msra.mxu0 0
      %1264 = vmatprep.subr.bf16.mxu0 0
      %1265 = vmatpush2.bf16.msra.mxu0 0
      %1266 = vmatprep.subr.bf16.mxu0 0
      %1267 = vmatpush2.bf16.msra.mxu0 0
      %1268 = vmatprep.subr.bf16.mxu0 0
      %1269 = vmatpush2.bf16.msra.mxu0 0
      %1270 = vmatprep.subr.bf16.mxu0 0
      %1271 = vmatpush2.bf16.msra.mxu0 0
      %1272 = vmatprep.subr.bf16.mxu0 0
      %1273 = vmatpush2.bf16.msra.mxu0 0
      %1274 = vmatprep.subr.bf16.mxu0 0
      %1275 = vmatpush2.bf16.msra.mxu0 0
      %1276 = vmatprep.subr.bf16.mxu0 0
      %1277 = vmatpush2.bf16.msra.mxu0 0
      %1278 = vmatprep.mubr.bf16.mxu0 0
      %1279 = vmatmul.mubr.bf16.gmra.mxu0 %v1230
      %v1280 = vpop.f32.mrf.mxu0
      %v1281 = vadd.f32 %v1121, %v1280
      %v1282 = vpop.f32.mrf.mxu0
      %v1283 = vadd.f32 %v1121, %v1282
      %v1284 = vpop.f32.mrf.mxu0
      %v1285 = vadd.f32 %v1126, %v1284
      %v1286 = vpop.f32.mrf.mxu0
      %v1287 = vadd.f32 %v1126, %v1286
      %1288 = vmatprep.mubr.bf16.mxu0 0
      %1289 = vmatmul.mubr.bf16.gmra.mxu0 %v1231
      %v1290 = vpop.f32.mrf.mxu0
      %v1291 = vadd.f32 %v1131, %v1290
      %v1292 = vpop.f32.mrf.mxu0
      %v1293 = vadd.f32 %v1131, %v1292
      %v1294 = vpop.f32.mrf.mxu0
      %v1295 = vadd.f32 %v1136, %v1294
      %v1296 = vpop.f32.mrf.mxu0
      %v1297 = vadd.f32 %v1136, %v1296
      %1298 = vmatprep.mubr.bf16.mxu0 0
      %1299 = vmatmul.mubr.bf16.gmra.mxu0 %v1232
      %v1300 = vpop.f32.mrf.mxu0
      %v1301 = vadd.f32 %v1141, %v1300
      %v1302 = vpop.f32.mrf.mxu0
      %v1303 = vadd.f32 %v1141, %v1302
      %v1304 = vpop.f32.mrf.mxu0
      %v1305 = vadd.f32 %v1146, %v1304
      %v1306 = vpop.f32.mrf.mxu0
      %v1307 = vadd.f32 %v1146, %v1306
      %1308 = vmatprep.mubr.bf16.mxu0 0
      %1309 = vmatmul.mubr.bf16.gmra.mxu0 %v1233
      %v1310 = vpop.f32.mrf.mxu0
      %v1311 = vadd.f32 %v1151, %v1310
      %v1312 = vpop.f32.mrf.mxu0
      %v1313 = vadd.f32 %v1151, %v1312
      %v1314 = vpop.f32.mrf.mxu0
      %v1315 = vadd.f32 %v1156, %v1314
      %v1316 = vpop.f32.mrf.mxu0
      %v1317 = vadd.f32 %v1156, %v1316
      %1318 = vmatprep.mubr.bf16.mxu0 0
      %1319 = vmatmul.mubr.bf16.gmra.mxu0 %v1234
      %v1320 = vpop.f32.mrf.mxu0
      %v1321 = vadd.f32 %v1161, %v1320
      %v1322 = vpop.f32.mrf.mxu0
      %v1323 = vadd.f32 %v1161, %v1322
      %v1324 = vpop.f32.mrf.mxu0
      %v1325 = vadd.f32 %v1166, %v1324
      %v1326 = vpop.f32.mrf.mxu0
      %v1327 = vadd.f32 %v1166, %v1326
      %1328 = vmatprep.mubr.bf16.mxu0 0
      %1329 = vmatmul.mubr.bf16.gmra.mxu0 %v1235
      %v1330 = vpop.f32.mrf.mxu0
      %v1331 = vadd.f32 %v1171, %v1330
      %v1332 = vpop.f32.mrf.mxu0
      %v1333 = vadd.f32 %v1171, %v1332
      %v1334 = vpop.f32.mrf.mxu0
      %v1335 = vadd.f32 %v1176, %v1334
      %v1336 = vpop.f32.mrf.mxu0
      %v1337 = vadd.f32 %v1176, %v1336
      %1338 = vmatprep.mubr.bf16.mxu0 0
      %1339 = vmatmul.mubr.bf16.gmra.mxu0 %v1236
      %v1340 = vpop.f32.mrf.mxu0
      %v1341 = vadd.f32 %v1181, %v1340
      %v1342 = vpop.f32.mrf.mxu0
      %v1343 = vadd.f32 %v1181, %v1342
      %v1344 = vpop.f32.mrf.mxu0
      %v1345 = vadd.f32 %v1186, %v1344
      %v1346 = vpop.f32.mrf.mxu0
      %v1347 = vadd.f32 %v1186, %v1346
      %1348 = vmatprep.mubr.bf16.mxu0 0
      %1349 = vmatmul.mubr.bf16.gmra.mxu0 %v1237
      %v1350 = vpop.f32.mrf.mxu0
      %v1351 = vadd.f32 %v1191, %v1350
      %v1352 = vpop.f32.mrf.mxu0
      %v1353 = vadd.f32 %v1191, %v1352
      %v1354 = vpop.f32.mrf.mxu0
      %v1355 = vadd.f32 %v1196, %v1354
      %v1356 = vpop.f32.mrf.mxu0
      %v1357 = vadd.f32 %v1196, %v1356
      %1358 = vdwg.mxu0
      %1359 = vmatprep.subr.bf16.mxu0 %v1081
      %1360 = vmatpush1.bf16.msra.mxu0 %v1080
      %1361 = vmatprep.subr.bf16.mxu0 %v1073
      %1362 = vmatpush1.bf16.msra.mxu0 %v1072
      %1363 = vmatprep.subr.bf16.mxu0 %v1065
      %1364 = vmatpush1.bf16.msra.mxu0 %v1064
      %1365 = vmatprep.subr.bf16.mxu0 %v1057
      %1366 = vmatpush1.bf16.msra.mxu0 %v1056
      %1367 = vmatprep.subr.bf16.mxu0 %v1049
      %1368 = vmatpush1.bf16.msra.mxu0 %v1048
      %1369 = vmatprep.subr.bf16.mxu0 %v1041
      %1370 = vmatpush1.bf16.msra.mxu0 %v1040
      %1371 = vmatprep.subr.bf16.mxu0 %v1033
      %1372 = vmatpush1.bf16.msra.mxu0 %v1032
      %1373 = vmatprep.subr.bf16.mxu0 %v1025
      %1374 = vmatpush1.bf16.msra.mxu0 %v1024
      %1375 = vmatprep.subr.bf16.mxu0 0
      %1376 = vmatpush2.bf16.msra.mxu0 0
      %1377 = vmatprep.subr.bf16.mxu0 0
      %1378 = vmatpush2.bf16.msra.mxu0 0
      %1379 = vmatprep.subr.bf16.mxu0 0
      %1380 = vmatpush2.bf16.msra.mxu0 0
      %1381 = vmatprep.subr.bf16.mxu0 0
      %1382 = vmatpush2.bf16.msra.mxu0 0
      %1383 = vmatprep.subr.bf16.mxu0 0
      %1384 = vmatpush2.bf16.msra.mxu0 0
      %1385 = vmatprep.subr.bf16.mxu0 0
      %1386 = vmatpush2.bf16.msra.mxu0 0
      %1387 = vmatprep.subr.bf16.mxu0 0
      %1388 = vmatpush2.bf16.msra.mxu0 0
      %1389 = vmatprep.subr.bf16.mxu0 0
      %1390 = vmatpush2.bf16.msra.mxu0 0
      %1391 = vmatprep.mubr.bf16.mxu0 0
      %1392 = vmatmul.mubr.bf16.gmra.mxu0 %v1230
      %v1393 = vpop.f32.mrf.mxu0
      %v1394 = vadd.f32 %v1121, %v1393
      %v1395 = vpop.f32.mrf.mxu0
      %v1396 = vadd.f32 %v1121, %v1395
      %v1397 = vpop.f32.mrf.mxu0
      %v1398 = vadd.f32 %v1126, %v1397
      %v1399 = vpop.f32.mrf.mxu0
      %v1400 = vadd.f32 %v1126, %v1399
      %1401 = vmatprep.mubr.bf16.mxu0 0
      %1402 = vmatmul.mubr.bf16.gmra.mxu0 %v1231
      %v1403 = vpop.f32.mrf.mxu0
      %v1404 = vadd.f32 %v1131, %v1403
      %v1405 = vpop.f32.mrf.mxu0
      %v1406 = vadd.f32 %v1131, %v1405
      %v1407 = vpop.f32.mrf.mxu0
      %v1408 = vadd.f32 %v1136, %v1407
      %v1409 = vpop.f32.mrf.mxu0
      %v1410 = vadd.f32 %v1136, %v1409
      %1411 = vmatprep.mubr.bf16.mxu0 0
      %1412 = vmatmul.mubr.bf16.gmra.mxu0 %v1232
      %v1413 = vpop.f32.mrf.mxu0
      %v1414 = vadd.f32 %v1141, %v1413
      %v1415 = vpop.f32.mrf.mxu0
      %v1416 = vadd.f32 %v1141, %v1415
      %v1417 = vpop.f32.mrf.mxu0
      %v1418 = vadd.f32 %v1146, %v1417
      %v1419 = vpop.f32.mrf.mxu0
      %v1420 = vadd.f32 %v1146, %v1419
      %1421 = vmatprep.mubr.bf16.mxu0 0
      %1422 = vmatmul.mubr.bf16.gmra.mxu0 %v1233
      %v1423 = vpop.f32.mrf.mxu0
      %v1424 = vadd.f32 %v1151, %v1423
      %v1425 = vpop.f32.mrf.mxu0
      %v1426 = vadd.f32 %v1151, %v1425
      %v1427 = vpop.f32.mrf.mxu0
      %v1428 = vadd.f32 %v1156, %v1427
      %v1429 = vpop.f32.mrf.mxu0
      %v1430 = vadd.f32 %v1156, %v1429
      %1431 = vmatprep.mubr.bf16.mxu0 0
      %1432 = vmatmul.mubr.bf16.gmra.mxu0 %v1234
      %v1433 = vpop.f32.mrf.mxu0
      %v1434 = vadd.f32 %v1161, %v1433
      %v1435 = vpop.f32.mrf.mxu0
      %v1436 = vadd.f32 %v1161, %v1435
      %v1437 = vpop.f32.mrf.mxu0
      %v1438 = vadd.f32 %v1166, %v1437
      %v1439 = vpop.f32.mrf.mxu0
      %v1440 = vadd.f32 %v1166, %v1439
      %1441 = vmatprep.mubr.bf16.mxu0 0
      %1442 = vmatmul.mubr.bf16.gmra.mxu0 %v1235
      %v1443 = vpop.f32.mrf.mxu0
      %v1444 = vadd.f32 %v1171, %v1443
      %v1445 = vpop.f32.mrf.mxu0
      %v1446 = vadd.f32 %v1171, %v1445
      %v1447 = vpop.f32.mrf.mxu0
      %v1448 = vadd.f32 %v1176, %v1447
      %v1449 = vpop.f32.mrf.mxu0
      %v1450 = vadd.f32 %v1176, %v1449
      %1451 = vmatprep.mubr.bf16.mxu0 0
      %1452 = vmatmul.mubr.bf16.gmra.mxu0 %v1236
      %v1453 = vpop.f32.mrf.mxu0
      %v1454 = vadd.f32 %v1181, %v1453
      %v1455 = vpop.f32.mrf.mxu0
      %v1456 = vadd.f32 %v1181, %v1455
      %v1457 = vpop.f32.mrf.mxu0
      %v1458 = vadd.f32 %v1186, %v1457
      %v1459 = vpop.f32.mrf.mxu0
      %v1460 = vadd.f32 %v1186, %v1459
      %1461 = vmatprep.mubr.bf16.mxu0 0
      %1462 = vmatmul.mubr.bf16.gmra.mxu0 %v1237
      %v1463 = vpop.f32.mrf.mxu0
      %v1464 = vadd.f32 %v1191, %v1463
      %v1465 = vpop.f32.mrf.mxu0
      %v1466 = vadd.f32 %v1191, %v1465
      %v1467 = vpop.f32.mrf.mxu0
      %v1468 = vadd.f32 %v1196, %v1467
      %v1469 = vpop.f32.mrf.mxu0
      %v1470 = vadd.f32 %v1196, %v1469
      %1471 = vdwg.mxu0
      %1472 = vmatprep.subr.bf16.mxu0 %v1083
      %1473 = vmatpush1.bf16.msra.mxu0 %v1082
      %1474 = vmatprep.subr.bf16.mxu0 %v1075
      %1475 = vmatpush1.bf16.msra.mxu0 %v1074
      %1476 = vmatprep.subr.bf16.mxu0 %v1067
      %1477 = vmatpush1.bf16.msra.mxu0 %v1066
      %1478 = vmatprep.subr.bf16.mxu0 %v1059
      %1479 = vmatpush1.bf16.msra.mxu0 %v1058
      %1480 = vmatprep.subr.bf16.mxu0 %v1051
      %1481 = vmatpush1.bf16.msra.mxu0 %v1050
      %1482 = vmatprep.subr.bf16.mxu0 %v1043
      %1483 = vmatpush1.bf16.msra.mxu0 %v1042
      %1484 = vmatprep.subr.bf16.mxu0 %v1035
      %1485 = vmatpush1.bf16.msra.mxu0 %v1034
      %1486 = vmatprep.subr.bf16.mxu0 %v1027
      %1487 = vmatpush1.bf16.msra.mxu0 %v1026
      %1488 = vmatprep.subr.bf16.mxu0 0
      %1489 = vmatpush2.bf16.msra.mxu0 0
      %1490 = vmatprep.subr.bf16.mxu0 0
      %1491 = vmatpush2.bf16.msra.mxu0 0
      %1492 = vmatprep.subr.bf16.mxu0 0
      %1493 = vmatpush2.bf16.msra.mxu0 0
      %1494 = vmatprep.subr.bf16.mxu0 0
      %1495 = vmatpush2.bf16.msra.mxu0 0
      %1496 = vmatprep.subr.bf16.mxu0 0
      %1497 = vmatpush2.bf16.msra.mxu0 0
      %1498 = vmatprep.subr.bf16.mxu0 0
      %1499 = vmatpush2.bf16.msra.mxu0 0
      %1500 = vmatprep.subr.bf16.mxu0 0
      %1501 = vmatpush2.bf16.msra.mxu0 0
      %1502 = vmatprep.subr.bf16.mxu0 0
      %1503 = vmatpush2.bf16.msra.mxu0 0
      %1504 = vmatprep.mubr.bf16.mxu0 0
      %1505 = vmatmul.mubr.bf16.gmra.mxu0 %v1230
      %v1506 = vpop.f32.mrf.mxu0
      %v1507 = vadd.f32 %v1121, %v1506
      %v1508 = vpop.f32.mrf.mxu0
      %v1509 = vadd.f32 %v1121, %v1508
      %v1510 = vpop.f32.mrf.mxu0
      %v1511 = vadd.f32 %v1126, %v1510
      %v1512 = vpop.f32.mrf.mxu0
      %v1513 = vadd.f32 %v1126, %v1512
      %1514 = vmatprep.mubr.bf16.mxu0 0
      %1515 = vmatmul.mubr.bf16.gmra.mxu0 %v1231
      %v1516 = vpop.f32.mrf.mxu0
      %v1517 = vadd.f32 %v1131, %v1516
      %v1518 = vpop.f32.mrf.mxu0
      %v1519 = vadd.f32 %v1131, %v1518
      %v1520 = vpop.f32.mrf.mxu0
      %v1521 = vadd.f32 %v1136, %v1520
      %v1522 = vpop.f32.mrf.mxu0
      %v1523 = vadd.f32 %v1136, %v1522
      %1524 = vmatprep.mubr.bf16.mxu0 0
      %1525 = vmatmul.mubr.bf16.gmra.mxu0 %v1232
      %v1526 = vpop.f32.mrf.mxu0
      %v1527 = vadd.f32 %v1141, %v1526
      %v1528 = vpop.f32.mrf.mxu0
      %v1529 = vadd.f32 %v1141, %v1528
      %v1530 = vpop.f32.mrf.mxu0
      %v1531 = vadd.f32 %v1146, %v1530
      %v1532 = vpop.f32.mrf.mxu0
      %v1533 = vadd.f32 %v1146, %v1532
      %1534 = vmatprep.mubr.bf16.mxu0 0
      %1535 = vmatmul.mubr.bf16.gmra.mxu0 %v1233
      %v1536 = vpop.f32.mrf.mxu0
      %v1537 = vadd.f32 %v1151, %v1536
      %v1538 = vpop.f32.mrf.mxu0
      %v1539 = vadd.f32 %v1151, %v1538
      %v1540 = vpop.f32.mrf.mxu0
      %v1541 = vadd.f32 %v1156, %v1540
      %v1542 = vpop.f32.mrf.mxu0
      %v1543 = vadd.f32 %v1156, %v1542
      %1544 = vmatprep.mubr.bf16.mxu0 0
      %1545 = vmatmul.mubr.bf16.gmra.mxu0 %v1234
      %v1546 = vpop.f32.mrf.mxu0
      %v1547 = vadd.f32 %v1161, %v1546
      %v1548 = vpop.f32.mrf.mxu0
      %v1549 = vadd.f32 %v1161, %v1548
      %v1550 = vpop.f32.mrf.mxu0
      %v1551 = vadd.f32 %v1166, %v1550
      %v1552 = vpop.f32.mrf.mxu0
      %v1553 = vadd.f32 %v1166, %v1552
      %1554 = vmatprep.mubr.bf16.mxu0 0
      %1555 = vmatmul.mubr.bf16.gmra.mxu0 %v1235
      %v1556 = vpop.f32.mrf.mxu0
      %v1557 = vadd.f32 %v1171, %v1556
      %v1558 = vpop.f32.mrf.mxu0
      %v1559 = vadd.f32 %v1171, %v1558
      %v1560 = vpop.f32.mrf.mxu0
      %v1561 = vadd.f32 %v1176, %v1560
      %v1562 = vpop.f32.mrf.mxu0
      %v1563 = vadd.f32 %v1176, %v1562
      %1564 = vmatprep.mubr.bf16.mxu0 0
      %1565 = vmatmul.mubr.bf16.gmra.mxu0 %v1236
      %v1566 = vpop.f32.mrf.mxu0
      %v1567 = vadd.f32 %v1181, %v1566
      %v1568 = vpop.f32.mrf.mxu0
      %v1569 = vadd.f32 %v1181, %v1568
      %v1570 = vpop.f32.mrf.mxu0
      %v1571 = vadd.f32 %v1186, %v1570
      %v1572 = vpop.f32.mrf.mxu0
      %v1573 = vadd.f32 %v1186, %v1572
      %1574 = vmatprep.mubr.bf16.mxu0 0
      %1575 = vmatmul.mubr.bf16.gmra.mxu0 %v1237
      %v1576 = vpop.f32.mrf.mxu0
      %v1577 = vadd.f32 %v1191, %v1576
      %v1578 = vpop.f32.mrf.mxu0
      %v1579 = vadd.f32 %v1191, %v1578
      %v1580 = vpop.f32.mrf.mxu0
      %v1581 = vadd.f32 %v1196, %v1580
      %v1582 = vpop.f32.mrf.mxu0
      %v1583 = vadd.f32 %v1196, %v1582
      %1584 = vdwg.mxu0
      %1585 = vmatprep.subr.bf16.mxu0 %v1085
      %1586 = vmatpush1.bf16.msra.mxu0 %v1084
      %1587 = vmatprep.subr.bf16.mxu0 %v1077
      %1588 = vmatpush1.bf16.msra.mxu0 %v1076
      %1589 = vmatprep.subr.bf16.mxu0 %v1069
      %1590 = vmatpush1.bf16.msra.mxu0 %v1068
      %1591 = vmatprep.subr.bf16.mxu0 %v1061
      %1592 = vmatpush1.bf16.msra.mxu0 %v1060
      %1593 = vmatprep.subr.bf16.mxu0 %v1053
      %1594 = vmatpush1.bf16.msra.mxu0 %v1052
      %1595 = vmatprep.subr.bf16.mxu0 %v1045
      %1596 = vmatpush1.bf16.msra.mxu0 %v1044
      %1597 = vmatprep.subr.bf16.mxu0 %v1037
      %1598 = vmatpush1.bf16.msra.mxu0 %v1036
      %1599 = vmatprep.subr.bf16.mxu0 %v1029
      %1600 = vmatpush1.bf16.msra.mxu0 %v1028
      %1601 = vmatprep.subr.bf16.mxu0 0
      %1602 = vmatpush2.bf16.msra.mxu0 0
      %1603 = vmatprep.subr.bf16.mxu0 0
      %1604 = vmatpush2.bf16.msra.mxu0 0
      %1605 = vmatprep.subr.bf16.mxu0 0
      %1606 = vmatpush2.bf16.msra.mxu0 0
      %1607 = vmatprep.subr.bf16.mxu0 0
      %1608 = vmatpush2.bf16.msra.mxu0 0
      %1609 = vmatprep.subr.bf16.mxu0 0
      %1610 = vmatpush2.bf16.msra.mxu0 0
      %1611 = vmatprep.subr.bf16.mxu0 0
      %1612 = vmatpush2.bf16.msra.mxu0 0
      %1613 = vmatprep.subr.bf16.mxu0 0
      %1614 = vmatpush2.bf16.msra.mxu0 0
      %1615 = vmatprep.subr.bf16.mxu0 0
      %1616 = vmatpush2.bf16.msra.mxu0 0
      %1617 = vmatprep.mubr.bf16.mxu0 0
      %1618 = vmatmul.mubr.bf16.gmra.mxu0 %v1230
      %v1619 = vpop.f32.mrf.mxu0
      %v1620 = vadd.f32 %v1121, %v1619
      %v1621 = vpop.f32.mrf.mxu0
      %v1622 = vadd.f32 %v1121, %v1621
      %v1623 = vpop.f32.mrf.mxu0
      %v1624 = vadd.f32 %v1126, %v1623
      %v1625 = vpop.f32.mrf.mxu0
      %v1626 = vadd.f32 %v1126, %v1625
      %1627 = vmatprep.mubr.bf16.mxu0 0
      %1628 = vmatmul.mubr.bf16.gmra.mxu0 %v1231
      %v1629 = vpop.f32.mrf.mxu0
      %v1630 = vadd.f32 %v1131, %v1629
      %v1631 = vpop.f32.mrf.mxu0
      %v1632 = vadd.f32 %v1131, %v1631
      %v1633 = vpop.f32.mrf.mxu0
      %v1634 = vadd.f32 %v1136, %v1633
      %v1635 = vpop.f32.mrf.mxu0
      %v1636 = vadd.f32 %v1136, %v1635
      %1637 = vmatprep.mubr.bf16.mxu0 0
      %1638 = vmatmul.mubr.bf16.gmra.mxu0 %v1232
      %v1639 = vpop.f32.mrf.mxu0
      %v1640 = vadd.f32 %v1141, %v1639
      %v1641 = vpop.f32.mrf.mxu0
      %v1642 = vadd.f32 %v1141, %v1641
      %v1643 = vpop.f32.mrf.mxu0
      %v1644 = vadd.f32 %v1146, %v1643
      %v1645 = vpop.f32.mrf.mxu0
      %v1646 = vadd.f32 %v1146, %v1645
      %1647 = vmatprep.mubr.bf16.mxu0 0
      %1648 = vmatmul.mubr.bf16.gmra.mxu0 %v1233
      %v1649 = vpop.f32.mrf.mxu0
      %v1650 = vadd.f32 %v1151, %v1649
      %v1651 = vpop.f32.mrf.mxu0
      %v1652 = vadd.f32 %v1151, %v1651
      %v1653 = vpop.f32.mrf.mxu0
      %v1654 = vadd.f32 %v1156, %v1653
      %v1655 = vpop.f32.mrf.mxu0
      %v1656 = vadd.f32 %v1156, %v1655
      %1657 = vmatprep.mubr.bf16.mxu0 0
      %1658 = vmatmul.mubr.bf16.gmra.mxu0 %v1234
      %v1659 = vpop.f32.mrf.mxu0
      %v1660 = vadd.f32 %v1161, %v1659
      %v1661 = vpop.f32.mrf.mxu0
      %v1662 = vadd.f32 %v1161, %v1661
      %v1663 = vpop.f32.mrf.mxu0
      %v1664 = vadd.f32 %v1166, %v1663
      %v1665 = vpop.f32.mrf.mxu0
      %v1666 = vadd.f32 %v1166, %v1665
      %1667 = vmatprep.mubr.bf16.mxu0 0
      %1668 = vmatmul.mubr.bf16.gmra.mxu0 %v1235
      %v1669 = vpop.f32.mrf.mxu0
      %v1670 = vadd.f32 %v1171, %v1669
      %v1671 = vpop.f32.mrf.mxu0
      %v1672 = vadd.f32 %v1171, %v1671
      %v1673 = vpop.f32.mrf.mxu0
      %v1674 = vadd.f32 %v1176, %v1673
      %v1675 = vpop.f32.mrf.mxu0
      %v1676 = vadd.f32 %v1176, %v1675
      %1677 = vmatprep.mubr.bf16.mxu0 0
      %1678 = vmatmul.mubr.bf16.gmra.mxu0 %v1236
      %v1679 = vpop.f32.mrf.mxu0
      %v1680 = vadd.f32 %v1181, %v1679
      %v1681 = vpop.f32.mrf.mxu0
      %v1682 = vadd.f32 %v1181, %v1681
      %v1683 = vpop.f32.mrf.mxu0
      %v1684 = vadd.f32 %v1186, %v1683
      %v1685 = vpop.f32.mrf.mxu0
      %v1686 = vadd.f32 %v1186, %v1685
      %1687 = vmatprep.mubr.bf16.mxu0 0
      %1688 = vmatmul.mubr.bf16.gmra.mxu0 %v1237
      %v1689 = vpop.f32.mrf.mxu0
      %v1690 = vadd.f32 %v1191, %v1689
      %v1691 = vpop.f32.mrf.mxu0
      %v1692 = vadd.f32 %v1191, %v1691
      %v1693 = vpop.f32.mrf.mxu0
      %v1694 = vadd.f32 %v1196, %v1693
      %v1695 = vpop.f32.mrf.mxu0
      %v1696 = vadd.f32 %v1196, %v1695
      %1697 = vdwg.mxu0
      %v1698 = vmax.f32 %v1281, 0.0
      %v1699 = vmax.f32 %v1283, 0.0
      %v1700 = vmax.f32 %v1394, 0.0
      %v1701 = vmax.f32 %v1396, 0.0
      %v1702 = vmax.f32 %v1507, 0.0
      %v1703 = vmax.f32 %v1509, 0.0
      %v1704 = vmax.f32 %v1620, 0.0
      %v1705 = vmax.f32 %v1622, 0.0
      %v1706 = vmax.f32 %v1285, 0.0
      %v1707 = vmax.f32 %v1287, 0.0
      %v1708 = vmax.f32 %v1398, 0.0
      %v1709 = vmax.f32 %v1400, 0.0
      %v1710 = vmax.f32 %v1511, 0.0
      %v1711 = vmax.f32 %v1513, 0.0
      %v1712 = vmax.f32 %v1624, 0.0
      %v1713 = vmax.f32 %v1626, 0.0
      %v1714 = vmax.f32 %v1291, 0.0
      %v1715 = vmax.f32 %v1293, 0.0
      %v1716 = vmax.f32 %v1404, 0.0
      %v1717 = vmax.f32 %v1406, 0.0
      %v1718 = vmax.f32 %v1517, 0.0
      %v1719 = vmax.f32 %v1519, 0.0
      %v1720 = vmax.f32 %v1630, 0.0
      %v1721 = vmax.f32 %v1632, 0.0
      %v1722 = vmax.f32 %v1295, 0.0
      %v1723 = vmax.f32 %v1297, 0.0
      %v1724 = vmax.f32 %v1408, 0.0
      %v1725 = vmax.f32 %v1410, 0.0
      %v1726 = vmax.f32 %v1521, 0.0
      %v1727 = vmax.f32 %v1523, 0.0
      %v1728 = vmax.f32 %v1634, 0.0
      %v1729 = vmax.f32 %v1636, 0.0
      %v1730 = vmax.f32 %v1301, 0.0
      %v1731 = vmax.f32 %v1303, 0.0
      %v1732 = vmax.f32 %v1414, 0.0
      %v1733 = vmax.f32 %v1416, 0.0
      %v1734 = vmax.f32 %v1527, 0.0
      %v1735 = vmax.f32 %v1529, 0.0
      %v1736 = vmax.f32 %v1640, 0.0
      %v1737 = vmax.f32 %v1642, 0.0
      %v1738 = vmax.f32 %v1305, 0.0
      %v1739 = vmax.f32 %v1307, 0.0
      %v1740 = vmax.f32 %v1418, 0.0
      %v1741 = vmax.f32 %v1420, 0.0
      %v1742 = vmax.f32 %v1531, 0.0
      %v1743 = vmax.f32 %v1533, 0.0
      %v1744 = vmax.f32 %v1644, 0.0
      %v1745 = vmax.f32 %v1646, 0.0
      %v1746 = vmax.f32 %v1311, 0.0
      %v1747 = vmax.f32 %v1313, 0.0
      %v1748 = vmax.f32 %v1424, 0.0
      %v1749 = vmax.f32 %v1426, 0.0
      %v1750 = vmax.f32 %v1537, 0.0
      %v1751 = vmax.f32 %v1539, 0.0
      %v1752 = vmax.f32 %v1650, 0.0
      %v1753 = vmax.f32 %v1652, 0.0
      %v1754 = vmax.f32 %v1315, 0.0
      %v1755 = vmax.f32 %v1317, 0.0
      %v1756 = vmax.f32 %v1428, 0.0
      %v1757 = vmax.f32 %v1430, 0.0
      %v1758 = vmax.f32 %v1541, 0.0
      %v1759 = vmax.f32 %v1543, 0.0
      %v1760 = vmax.f32 %v1654, 0.0
      %v1761 = vmax.f32 %v1656, 0.0
      %v1762 = vmax.f32 %v1321, 0.0
      %v1763 = vmax.f32 %v1323, 0.0
      %v1764 = vmax.f32 %v1434, 0.0
      %v1765 = vmax.f32 %v1436, 0.0
      %v1766 = vmax.f32 %v1547, 0.0
      %v1767 = vmax.f32 %v1549, 0.0
      %v1768 = vmax.f32 %v1660, 0.0
      %v1769 = vmax.f32 %v1662, 0.0
      %v1770 = vmax.f32 %v1325, 0.0
      %v1771 = vmax.f32 %v1327, 0.0
      %v1772 = vmax.f32 %v1438, 0.0
      %v1773 = vmax.f32 %v1440, 0.0
      %v1774 = vmax.f32 %v1551, 0.0
      %v1775 = vmax.f32 %v1553, 0.0
      %v1776 = vmax.f32 %v1664, 0.0
      %v1777 = vmax.f32 %v1666, 0.0
      %v1778 = vmax.f32 %v1331, 0.0
      %v1779 = vmax.f32 %v1333, 0.0
      %v1780 = vmax.f32 %v1444, 0.0
      %v1781 = vmax.f32 %v1446, 0.0
      %v1782 = vmax.f32 %v1557, 0.0
      %v1783 = vmax.f32 %v1559, 0.0
      %v1784 = vmax.f32 %v1670, 0.0
      %v1785 = vmax.f32 %v1672, 0.0
      %v1786 = vmax.f32 %v1335, 0.0
      %v1787 = vmax.f32 %v1337, 0.0
      %v1788 = vmax.f32 %v1448, 0.0
      %v1789 = vmax.f32 %v1450, 0.0
      %v1790 = vmax.f32 %v1561, 0.0
      %v1791 = vmax.f32 %v1563, 0.0
      %v1792 = vmax.f32 %v1674, 0.0
      %v1793 = vmax.f32 %v1676, 0.0
      %v1794 = vmax.f32 %v1341, 0.0
      %v1795 = vmax.f32 %v1343, 0.0
      %v1796 = vmax.f32 %v1454, 0.0
      %v1797 = vmax.f32 %v1456, 0.0
      %v1798 = vmax.f32 %v1567, 0.0
      %v1799 = vmax.f32 %v1569, 0.0
      %v1800 = vmax.f32 %v1680, 0.0
      %v1801 = vmax.f32 %v1682, 0.0
      %v1802 = vmax.f32 %v1345, 0.0
      %v1803 = vmax.f32 %v1347, 0.0
      %v1804 = vmax.f32 %v1458, 0.0
      %v1805 = vmax.f32 %v1460, 0.0
      %v1806 = vmax.f32 %v1571, 0.0
      %v1807 = vmax.f32 %v1573, 0.0
      %v1808 = vmax.f32 %v1684, 0.0
      %v1809 = vmax.f32 %v1686, 0.0
      %v1810 = vmax.f32 %v1351, 0.0
      %v1811 = vmax.f32 %v1353, 0.0
      %v1812 = vmax.f32 %v1464, 0.0
      %v1813 = vmax.f32 %v1466, 0.0
      %v1814 = vmax.f32 %v1577, 0.0
      %v1815 = vmax.f32 %v1579, 0.0
      %v1816 = vmax.f32 %v1690, 0.0
      %v1817 = vmax.f32 %v1692, 0.0
      %v1818 = vmax.f32 %v1355, 0.0
      %v1819 = vmax.f32 %v1357, 0.0
      %v1820 = vmax.f32 %v1468, 0.0
      %v1821 = vmax.f32 %v1470, 0.0
      %v1822 = vmax.f32 %v1581, 0.0
      %v1823 = vmax.f32 %v1583, 0.0
      %v1824 = vmax.f32 %v1694, 0.0
      %v1825 = vmax.f32 %v1696, 0.0
      %v1826 = vpack.c.bf16 %v1706, %v1698
      %v1827 = vpack.c.bf16 %v1707, %v1699
      %v1828 = vpack.c.bf16 %v1708, %v1700
      %v1829 = vpack.c.bf16 %v1709, %v1701
      %v1830 = vpack.c.bf16 %v1710, %v1702
      %v1831 = vpack.c.bf16 %v1711, %v1703
      %v1832 = vpack.c.bf16 %v1712, %v1704
      %v1833 = vpack.c.bf16 %v1713, %v1705
      %v1834 = vpack.c.bf16 %v1722, %v1714
      %v1835 = vpack.c.bf16 %v1723, %v1715
      %v1836 = vpack.c.bf16 %v1724, %v1716
      %v1837 = vpack.c.bf16 %v1725, %v1717
      %v1838 = vpack.c.bf16 %v1726, %v1718
      %v1839 = vpack.c.bf16 %v1727, %v1719
      %v1840 = vpack.c.bf16 %v1728, %v1720
      %v1841 = vpack.c.bf16 %v1729, %v1721
      %v1842 = vpack.c.bf16 %v1738, %v1730
      %v1843 = vpack.c.bf16 %v1739, %v1731
      %v1844 = vpack.c.bf16 %v1740, %v1732
      %v1845 = vpack.c.bf16 %v1741, %v1733
      %v1846 = vpack.c.bf16 %v1742, %v1734
      %v1847 = vpack.c.bf16 %v1743, %v1735
      %v1848 = vpack.c.bf16 %v1744, %v1736
      %v1849 = vpack.c.bf16 %v1745, %v1737
      %v1850 = vpack.c.bf16 %v1754, %v1746
      %v1851 = vpack.c.bf16 %v1755, %v1747
      %v1852 = vpack.c.bf16 %v1756, %v1748
      %v1853 = vpack.c.bf16 %v1757, %v1749
      %v1854 = vpack.c.bf16 %v1758, %v1750
      %v1855 = vpack.c.bf16 %v1759, %v1751
      %v1856 = vpack.c.bf16 %v1760, %v1752
      %v1857 = vpack.c.bf16 %v1761, %v1753
      %v1858 = vpack.c.bf16 %v1770, %v1762
      %v1859 = vpack.c.bf16 %v1771, %v1763
      %v1860 = vpack.c.bf16 %v1772, %v1764
      %v1861 = vpack.c.bf16 %v1773, %v1765
      %v1862 = vpack.c.bf16 %v1774, %v1766
      %v1863 = vpack.c.bf16 %v1775, %v1767
      %v1864 = vpack.c.bf16 %v1776, %v1768
      %v1865 = vpack.c.bf16 %v1777, %v1769
      %v1866 = vpack.c.bf16 %v1786, %v1778
      %v1867 = vpack.c.bf16 %v1787, %v1779
      %v1868 = vpack.c.bf16 %v1788, %v1780
      %v1869 = vpack.c.bf16 %v1789, %v1781
      %v1870 = vpack.c.bf16 %v1790, %v1782
      %v1871 = vpack.c.bf16 %v1791, %v1783
      %v1872 = vpack.c.bf16 %v1792, %v1784
      %v1873 = vpack.c.bf16 %v1793, %v1785
      %v1874 = vpack.c.bf16 %v1802, %v1794
      %v1875 = vpack.c.bf16 %v1803, %v1795
      %v1876 = vpack.c.bf16 %v1804, %v1796
      %v1877 = vpack.c.bf16 %v1805, %v1797
      %v1878 = vpack.c.bf16 %v1806, %v1798
      %v1879 = vpack.c.bf16 %v1807, %v1799
      %v1880 = vpack.c.bf16 %v1808, %v1800
      %v1881 = vpack.c.bf16 %v1809, %v1801
      %v1882 = vpack.c.bf16 %v1818, %v1810
      %v1883 = vpack.c.bf16 %v1819, %v1811
      %v1884 = vpack.c.bf16 %v1820, %v1812
      %v1885 = vpack.c.bf16 %v1821, %v1813
      %v1886 = vpack.c.bf16 %v1822, %v1814
      %v1887 = vpack.c.bf16 %v1823, %v1815
      %v1888 = vpack.c.bf16 %v1824, %v1816
      %v1889 = vpack.c.bf16 %v1825, %v1817
      %v1890 = vld [vmem:[%s4] sm:$0x3]
      %1891 = vmatprep.subr.bf16.mxu0 %v1883
      %1892 = vmatpush1.bf16.msra.mxu0 %v1882
      %1893 = vmatprep.subr.bf16.mxu0 %v1875
      %1894 = vmatpush1.bf16.msra.mxu0 %v1874
      %1895 = vmatprep.subr.bf16.mxu0 %v1867
      %1896 = vmatpush1.bf16.msra.mxu0 %v1866
      %1897 = vmatprep.subr.bf16.mxu0 %v1859
      %1898 = vmatpush1.bf16.msra.mxu0 %v1858
      %1899 = vmatprep.subr.bf16.mxu0 %v1851
      %1900 = vmatpush1.bf16.msra.mxu0 %v1850
      %1901 = vmatprep.subr.bf16.mxu0 %v1843
      %1902 = vmatpush1.bf16.msra.mxu0 %v1842
      %1903 = vmatprep.subr.bf16.mxu0 %v1835
      %1904 = vmatpush1.bf16.msra.mxu0 %v1834
      %1905 = vmatprep.subr.bf16.mxu0 %v1827
      %1906 = vmatpush1.bf16.msra.mxu0 %v1826
      %1907 = vmatprep.subr.bf16.mxu0 0
      %1908 = vmatpush2.bf16.msra.mxu0 0
      %1909 = vmatprep.subr.bf16.mxu0 0
      %1910 = vmatpush2.bf16.msra.mxu0 0
      %1911 = vmatprep.subr.bf16.mxu0 0
      %1912 = vmatpush2.bf16.msra.mxu0 0
      %1913 = vmatprep.subr.bf16.mxu0 0
      %1914 = vmatpush2.bf16.msra.mxu0 0
      %1915 = vmatprep.subr.bf16.mxu0 0
      %1916 = vmatpush2.bf16.msra.mxu0 0
      %1917 = vmatprep.subr.bf16.mxu0 0
      %1918 = vmatpush2.bf16.msra.mxu0 0
      %1919 = vmatprep.subr.bf16.mxu0 0
      %1920 = vmatpush2.bf16.msra.mxu0 0
      %1921 = vmatprep.subr.bf16.mxu0 0
      %1922 = vmatpush2.bf16.msra.mxu0 0
      %1923 = vmatprep.mubr.bf16.mxu0 0
      %1924 = vmatmul.mubr.bf16.gmra.mxu0 %v1890
      %v1925 = vpop.f32.mrf.mxu0
      %v1926 = vadd.f32 0.0, %v1925
      %v1927 = vpop.f32.mrf.mxu0
      %v1928 = vadd.f32 0.0, %v1927
      %v1929 = vpop.f32.mrf.mxu0
      %v1930 = vpop.f32.mrf.mxu0
      %1931 = vdwg.mxu0
      %1932 = vmatprep.subr.bf16.mxu0 %v1885
      %1933 = vmatpush1.bf16.msra.mxu0 %v1884
      %1934 = vmatprep.subr.bf16.mxu0 %v1877
      %1935 = vmatpush1.bf16.msra.mxu0 %v1876
      %1936 = vmatprep.subr.bf16.mxu0 %v1869
      %1937 = vmatpush1.bf16.msra.mxu0 %v1868
      %1938 = vmatprep.subr.bf16.mxu0 %v1861
      %1939 = vmatpush1.bf16.msra.mxu0 %v1860
      %1940 = vmatprep.subr.bf16.mxu0 %v1853
      %1941 = vmatpush1.bf16.msra.mxu0 %v1852
      %1942 = vmatprep.subr.bf16.mxu0 %v1845
      %1943 = vmatpush1.bf16.msra.mxu0 %v1844
      %1944 = vmatprep.subr.bf16.mxu0 %v1837
      %1945 = vmatpush1.bf16.msra.mxu0 %v1836
      %1946 = vmatprep.subr.bf16.mxu0 %v1829
      %1947 = vmatpush1.bf16.msra.mxu0 %v1828
      %1948 = vmatprep.subr.bf16.mxu0 0
      %1949 = vmatpush2.bf16.msra.mxu0 0
      %1950 = vmatprep.subr.bf16.mxu0 0
      %1951 = vmatpush2.bf16.msra.mxu0 0
      %1952 = vmatprep.subr.bf16.mxu0 0
      %1953 = vmatpush2.bf16.msra.mxu0 0
      %1954 = vmatprep.subr.bf16.mxu0 0
      %1955 = vmatpush2.bf16.msra.mxu0 0
      %1956 = vmatprep.subr.bf16.mxu0 0
      %1957 = vmatpush2.bf16.msra.mxu0 0
      %1958 = vmatprep.subr.bf16.mxu0 0
      %1959 = vmatpush2.bf16.msra.mxu0 0
      %1960 = vmatprep.subr.bf16.mxu0 0
      %1961 = vmatpush2.bf16.msra.mxu0 0
      %1962 = vmatprep.subr.bf16.mxu0 0
      %1963 = vmatpush2.bf16.msra.mxu0 0
      %1964 = vmatprep.mubr.bf16.mxu0 0
      %1965 = vmatmul.mubr.bf16.gmra.mxu0 %v1890
      %v1966 = vpop.f32.mrf.mxu0
      %v1967 = vadd.f32 0.0, %v1966
      %v1968 = vpop.f32.mrf.mxu0
      %v1969 = vadd.f32 0.0, %v1968
      %v1970 = vpop.f32.mrf.mxu0
      %v1971 = vpop.f32.mrf.mxu0
      %1972 = vdwg.mxu0
      %1973 = vmatprep.subr.bf16.mxu0 %v1887
      %1974 = vmatpush1.bf16.msra.mxu0 %v1886
      %1975 = vmatprep.subr.bf16.mxu0 %v1879
      %1976 = vmatpush1.bf16.msra.mxu0 %v1878
      %1977 = vmatprep.subr.bf16.mxu0 %v1871
      %1978 = vmatpush1.bf16.msra.mxu0 %v1870
      %1979 = vmatprep.subr.bf16.mxu0 %v1863
      %1980 = vmatpush1.bf16.msra.mxu0 %v1862
      %1981 = vmatprep.subr.bf16.mxu0 %v1855
      %1982 = vmatpush1.bf16.msra.mxu0 %v1854
      %1983 = vmatprep.subr.bf16.mxu0 %v1847
      %1984 = vmatpush1.bf16.msra.mxu0 %v1846
      %1985 = vmatprep.subr.bf16.mxu0 %v1839
      %1986 = vmatpush1.bf16.msra.mxu0 %v1838
      %1987 = vmatprep.subr.bf16.mxu0 %v1831
      %1988 = vmatpush1.bf16.msra.mxu0 %v1830
      %1989 = vmatprep.subr.bf16.mxu0 0
      %1990 = vmatpush2.bf16.msra.mxu0 0
      %1991 = vmatprep.subr.bf16.mxu0 0
      %1992 = vmatpush2.bf16.msra.mxu0 0
      %1993 = vmatprep.subr.bf16.mxu0 0
      %1994 = vmatpush2.bf16.msra.mxu0 0
      %1995 = vmatprep.subr.bf16.mxu0 0
      %1996 = vmatpush2.bf16.msra.mxu0 0
      %1997 = vmatprep.subr.bf16.mxu0 0
      %1998 = vmatpush2.bf16.msra.mxu0 0
      %1999 = vmatprep.subr.bf16.mxu0 0
      %2000 = vmatpush2.bf16.msra.mxu0 0
      %2001 = vmatprep.subr.bf16.mxu0 0
      %2002 = vmatpush2.bf16.msra.mxu0 0
      %2003 = vmatprep.subr.bf16.mxu0 0
      %2004 = vmatpush2.bf16.msra.mxu0 0
      %2005 = vmatprep.mubr.bf16.mxu0 0
      %2006 = vmatmul.mubr.bf16.gmra.mxu0 %v1890
      %v2007 = vpop.f32.mrf.mxu0
      %v2008 = vadd.f32 0.0, %v2007
      %v2009 = vpop.f32.mrf.mxu0
      %v2010 = vadd.f32 0.0, %v2009
      %v2011 = vpop.f32.mrf.mxu0
      %v2012 = vpop.f32.mrf.mxu0
      %2013 = vdwg.mxu0
      %2014 = vmatprep.subr.bf16.mxu0 %v1889
      %2015 = vmatpush1.bf16.msra.mxu0 %v1888
      %2016 = vmatprep.subr.bf16.mxu0 %v1881
      %2017 = vmatpush1.bf16.msra.mxu0 %v1880
      %2018 = vmatprep.subr.bf16.mxu0 %v1873
      %2019 = vmatpush1.bf16.msra.mxu0 %v1872
      %2020 = vmatprep.subr.bf16.mxu0 %v1865
      %2021 = vmatpush1.bf16.msra.mxu0 %v1864
      %2022 = vmatprep.subr.bf16.mxu0 %v1857
      %2023 = vmatpush1.bf16.msra.mxu0 %v1856
      %2024 = vmatprep.subr.bf16.mxu0 %v1849
      %2025 = vmatpush1.bf16.msra.mxu0 %v1848
      %2026 = vmatprep.subr.bf16.mxu0 %v1841
      %2027 = vmatpush1.bf16.msra.mxu0 %v1840
      %2028 = vmatprep.subr.bf16.mxu0 %v1833
      %2029 = vmatpush1.bf16.msra.mxu0 %v1832
      %2030 = vmatprep.subr.bf16.mxu0 0
      %2031 = vmatpush2.bf16.msra.mxu0 0
      %2032 = vmatprep.subr.bf16.mxu0 0
      %2033 = vmatpush2.bf16.msra.mxu0 0
      %2034 = vmatprep.subr.bf16.mxu0 0
      %2035 = vmatpush2.bf16.msra.mxu0 0
      %2036 = vmatprep.subr.bf16.mxu0 0
      %2037 = vmatpush2.bf16.msra.mxu0 0
      %2038 = vmatprep.subr.bf16.mxu0 0
      %2039 = vmatpush2.bf16.msra.mxu0 0
      %2040 = vmatprep.subr.bf16.mxu0 0
      %2041 = vmatpush2.bf16.msra.mxu0 0
      %2042 = vmatprep.subr.bf16.mxu0 0
      %2043 = vmatpush2.bf16.msra.mxu0 0
      %2044 = vmatprep.subr.bf16.mxu0 0
      %2045 = vmatpush2.bf16.msra.mxu0 0
      %2046 = vmatprep.mubr.bf16.mxu0 0
      %2047 = vmatmul.mubr.bf16.gmra.mxu0 %v1890
      %v2048 = vpop.f32.mrf.mxu0
      %v2049 = vadd.f32 0.0, %v2048
      %v2050 = vpop.f32.mrf.mxu0
      %v2051 = vadd.f32 0.0, %v2050
      %v2052 = vpop.f32.mrf.mxu0
      %v2053 = vpop.f32.mrf.mxu0
      %2054 = vdwg.mxu0
      %v2063 = vcombine.low %v1926, %v1928
      %v2064 = vcombine.low %v1967, %v1969
      %v2065 = vcombine.low %v2008, %v2010
      %v2066 = vcombine.low %v2049, %v2051
      %v2071 = vadd.f32 %v312, %v2063
      %v2072 = vadd.f32 %v313, %v2064
      %v2073 = vadd.f32 %v314, %v2065
      %v2074 = vadd.f32 %v315, %v2066
      %v2075 = vld [vmem:[%s5] sm:$0x7]
      %2077 = vset.pattern.permute.xlu0 0
      %2078 = vperm.xlu0 %2077, %v2075
      %v2079 = vpop.permute.xlu0 %2078
      %v2081 = vunpack.c.l.s4 839922192
      %v2082 = vunpack.c.0.s8 %v2081
      %v2083 = vlaneseq
      %v2084 = vshrl.u32 %v2083, 7
      %v2085 = vsub.s32 %v2082, %v2084
      %v2086 = vrot.slane %v2079, %v2085
      %v2088 = vadd.f32 %v2071, %v2086
      %v2089 = vadd.f32 %v2072, %v2086
      %v2090 = vadd.f32 %v2073, %v2086
      %v2091 = vadd.f32 %v2074, %v2086
      %2092 = vst [vmem:[%s309] sm:$0x77] %v2088
      %2093 = vst [vmem:[%s309 + $0x8] sm:$0x77] %v2089
      %2094 = vst [vmem:[%s309 + $0x10] sm:$0x77] %v2090
      %2095 = vst [vmem:[%s309 + $0x18] sm:$0x77] %v2091
      %s2096 = smul.u32 8, %s22
      %p2097 = scmp.lt.s32.totalorder %s21, 1
      %s2098 = scalar_select %p2097, %s21, 1
      %p2099 = scmp.lt.s32.totalorder %s2096, 7
      %s2100 = scalar_select %p2099, %s2096, 7
      %s2101 = smul.addr %s2098, 8
      %s2102 = sadd.s32 %s2100, %s2101
      %s2103 = smul.addr %s2102, 4
      %s2104 = scalar_lea.vmem %s6, %s2103
      // Predicated region
      $region45: #{ensemble_autodecoder.1} parent=43 // pred_check
        %p2105 = pneg %p187
      $region46: #{ensemble_autodecoder.1} parent=43 // pred_check_branch
        %2107 = sbr.rel (%p2105) target = $region48
      $region47: #{ensemble_autodecoder.1} parent=43 // pred_region
        %s2108 = smul.u32 8, %s22
      $region48: #{ensemble_autodecoder.1} parent=43 // pred_fallthru
        _
    $region44: #{ensemble_autodecoder.1} parent=5 // pred_fallthru
      _
    %p2109 = scmp.le.s32.totalorder 2, %s12
    // Predicated region
    $region49: #{ensemble_autodecoder.1} parent=5 // pred_check
      %p2110 = pneg %p2109
    $region50: #{ensemble_autodecoder.1} parent=5 // pred_check_branch
      %2112 = sbr.rel (%p2110) target = $region52
    $region51: #{ensemble_autodecoder.1} parent=5 // pred_region
      %s2113 = ssub.s32 %s12, 2
      // Predicated region
      $region53: #{ensemble_autodecoder.1} parent=51 // pred_check
        %p2114 = pneg %p193
      $region54: #{ensemble_autodecoder.1} parent=51 // pred_check_branch
        %2116 = sbr.rel (%p2114) target = $region56
      $region55: #{ensemble_autodecoder.1} parent=51 // pred_region
        %s2117 = smul.u32 8, %s24
        %p2118 = scmp.lt.s32.totalorder %s23, 1
        %s2119 = scalar_select %p2118, %s23, 1
        %p2120 = scmp.lt.s32.totalorder %s2117, 7
        %s2121 = scalar_select %p2120, %s2117, 7
        %s2122 = smul.addr %s2119, 8
        %s2123 = sadd.s32 %s2121, %s2122
        %s2124 = smul.addr %s2123, 4
        %s2125 = scalar_lea.vmem %s6, %s2124
      $region56: #{ensemble_autodecoder.1} parent=51 // pred_fallthru
        _
    $region52: #{ensemble_autodecoder.1} parent=5 // pred_fallthru
      _
  $region6: #{ensemble_autodecoder.1} parent=0 // loop_footer
    %s16 = sadd.s32 1, %s12
  $region7: #{ensemble_autodecoder.1} parent=0 // loop_footer_branch
    %11 = sbr.rel target = $region3
  $region8: #{ensemble_autodecoder.1} parent=0 // loop_exit
    _

</llo_original>
